<compile_context>
chip_gen: v5e
topology: v5e:2x2
jax: 0.10.0
libtpu: 0.0.40
codegen_flags: <defaults>
</compile_context>

<pallas_src>
import math
from functools import partial

import jax
import jax.numpy as jnp
from jax.experimental import pallas as pl
from jax.experimental.pallas import tpu as pltpu


def _mha_kernel(q_ref, k_ref, v_ref, bias_ref,
                wq_ref, bq_ref, wk_ref, bk_ref, wv_ref, bv_ref,
                wo_ref, bo_ref, out_ref,
                k_scr, v_scr, *, n_heads, d_k, d_v):
    # Refs (batch dim squeezed):
    #   q_ref: (tq, d_model)  k_ref/v_ref: (Lk, d_model)  bias_ref: (H, tq, Lk)
    #   k_scr: (H, Lk, d_k)   v_scr: (H, Lk, d_v)   out_ref: (tq, d_model)
    qi = pl.program_id(1)

    # ---- K / V projection: once per batch element, stored head-major in VMEM ----
    @pl.when(qi == 0)
    def _():
        K = (jnp.dot(k_ref[...], wk_ref[...], preferred_element_type=jnp.float32)
             + bk_ref[...]).astype(k_scr.dtype)
        V = (jnp.dot(v_ref[...], wv_ref[...], preferred_element_type=jnp.float32)
             + bv_ref[...]).astype(v_scr.dtype)
        for h in range(n_heads):                     # static unroll: data staging only
            k_scr[h] = K[:, h * d_k:(h + 1) * d_k]
            v_scr[h] = V[:, h * d_v:(h + 1) * d_v]

    # ---- Q projection for this query tile (1/sqrt(d_k) folded into wq/bq) ----
    Q = (jnp.dot(q_ref[...], wq_ref[...], preferred_element_type=jnp.float32)
         + bq_ref[...]).astype(k_scr.dtype)
    Qh = jnp.stack([Q[:, h * d_k:(h + 1) * d_k] for h in range(n_heads)],
                   axis=0)                            # (H, tq, d_k)
    Kh = k_scr[...]                                   # (H, Lk, d_k)
    Vh = v_scr[...]                                   # (H, Lk, d_v)

    # ---- head-batched attention: one contraction for all heads, no explicit .T ----
    s = jnp.einsum('hqd,hkd->hqk', Qh, Kh,
                   preferred_element_type=jnp.float32)          # (H, tq, Lk)
    s = s + bias_ref[...].astype(jnp.float32)

    m = jnp.max(s, axis=-1, keepdims=True)
    p = jnp.exp(s - m)
    l = jnp.sum(p, axis=-1, keepdims=True)
    p = (p * pl.reciprocal(l, approx=True)).astype(Vh.dtype)    # EUP reciprocal

    ctx = jnp.einsum('hqk,hkd->hqd', p, Vh,
                     preferred_element_type=jnp.float32)        # (H, tq, d_v)
    ctx_flat = jnp.concatenate([ctx[h] for h in range(n_heads)],
                               axis=-1)                         # (tq, H*d_v)

    # ---- output projection: single full-width matmul ----
    out = (jnp.dot(ctx_flat.astype(wo_ref.dtype), wo_ref[...],
                   preferred_element_type=jnp.float32) + bo_ref[...])
    out_ref[...] = out.astype(out_ref.dtype)


def _pick_q_tile(Lq, target=256):
    """Largest q-tile <= target that divides Lq and keeps (8,128) tiling legal."""
    if Lq <= target:
        return Lq
    for t in range(target, 7, -1):
        if Lq % t == 0 and t % 8 == 0:
            return t
    return Lq


def multi_head_attention(q, k, v, bias, params, *, n_heads, d_k, d_v,
                         q_tile=None, vmem_limit_bytes=48 * 1024 * 1024):
    """q,k,v: [B, L, d_model]; bias: [B, n_heads, Lq, Lk]; returns [B, Lq, d_model]."""
    # Module semantics: k defaults to q, v defaults to k.
    if k is None:
        k = q
    if v is None:
        v = k

    B, Lq, d_model = q.shape
    Lk = k.shape[1]
    wq, bq, wk, bk, wv, bv, wo, bo = params

    # Fold the softmax scale into the Q projection (zero runtime cost).
    scale = jnp.asarray(1.0 / math.sqrt(d_k), dtype=wq.dtype)
    wq = wq * scale
    bq = bq * scale

    tq = q_tile or _pick_q_tile(Lq)
    nq = Lq // tq

    kernel = partial(_mha_kernel, n_heads=n_heads, d_k=d_k, d_v=d_v)
    w2d = lambda arr: pl.BlockSpec(arr.shape, lambda b, i: (0, 0))

    return pl.pallas_call(
        kernel,
        out_shape=jax.ShapeDtypeStruct((B, Lq, d_model), q.dtype),
        grid=(B, nq),
        in_specs=[
            pl.BlockSpec((None, tq, d_model), lambda b, i: (b, i, 0)),        # q tile
            pl.BlockSpec((None, Lk, d_model), lambda b, i: (b, 0, 0)),        # k (once per b)
            pl.BlockSpec((None, Lk, d_model), lambda b, i: (b, 0, 0)),        # v (once per b)
            pl.BlockSpec((None, n_heads, tq, Lk), lambda b, i: (b, 0, i, 0)), # bias tile
            w2d(wq), w2d(bq),
            w2d(wk), w2d(bk),
            w2d(wv), w2d(bv),
            w2d(wo), w2d(bo),
        ],
        out_specs=pl.BlockSpec((None, tq, d_model), lambda b, i: (b, i, 0)),
        scratch_shapes=[
            pltpu.VMEM((n_heads, Lk, d_k), k.dtype),   # head-major projected K
            pltpu.VMEM((n_heads, Lk, d_v), v.dtype),   # head-major projected V
        ],
        compiler_params=pltpu.CompilerParams(
            dimension_semantics=("parallel", "arbitrary"),
            vmem_limit_bytes=vmem_limit_bytes),
    )(q, k, v, bias, wq, bq, wk, bk, wv, bv, wo, bo)


def _reference(q, k, v, bias, params, *, n_heads, d_k, d_v):
    """Pure-JAX reference reproducing the PyTorch forward (no cache, dropout=0)."""
    wq, bq, wk, bk, wv, bv, wo, bo = params
    B, Lq, d_model = q.shape

    Q = q @ wq + bq[0]
    K = k @ wk + bk[0]
    V = v @ wv + bv[0]

    def shape(x, d):
        return x.reshape(B, -1, n_heads, d).transpose(0, 2, 1, 3)

    Qh = shape(Q, d_k)
    Kh = shape(K, d_k)
    Vh = shape(V, d_v)

    scores = jnp.einsum("bhqd,bhkd->bhqk", Qh, Kh) / math.sqrt(d_k) + bias
    attn = jax.nn.softmax(scores, axis=-1)
    ctx = jnp.einsum("bhqk,bhkd->bhqd", attn, Vh)
    ctx = ctx.transpose(0, 2, 1, 3).reshape(B, Lq, n_heads * d_v)
    return ctx @ wo + bo[0]


if __name__ == "__main__":
    B, L, n_heads, d_k, d_v = 2, 8, 4, 8, 8
    d_model = n_heads * d_k   # 32

    key = jax.random.PRNGKey(0)
    keys = jax.random.split(key, 12)

    q = jax.random.normal(keys[0], (B, L, d_model), dtype=jnp.float32)
    k = jax.random.normal(keys[1], (B, L, d_model), dtype=jnp.float32)
    v = jax.random.normal(keys[2], (B, L, d_model), dtype=jnp.float32)
    # attention bias / mask: mostly 0, a few large-negative entries
    bias = jnp.where(jax.random.uniform(keys[3], (B, n_heads, L, L)) > 0.9,
                     -1e9, 0.0).astype(jnp.float32)

    def lin(kw, kb, fan_in, fan_out):
        w = 0.1 * jax.random.normal(kw, (fan_in, fan_out), dtype=jnp.float32)
        b = 0.1 * jax.random.normal(kb, (1, fan_out), dtype=jnp.float32)
        return w, b

    wq, bq = lin(keys[4], keys[5], d_model, n_heads * d_k)
    wk, bk = lin(keys[6], keys[7], d_model, n_heads * d_k)
    wv, bv = lin(keys[8], keys[9], d_model, n_heads * d_v)
    wo, bo = lin(keys[10], keys[11], n_heads * d_v, d_model)
    params = (wq, bq, wk, bk, wv, bv, wo, bo)

    out = multi_head_attention(q, k, v, bias, params,
                               n_heads=n_heads, d_k=d_k, d_v=d_v)
    out = jax.block_until_ready(out)

    ref = _reference(q, k, v, bias, params, n_heads=n_heads, d_k=d_k, d_v=d_v)
    assert out.shape == (B, L, d_model)
    err = jnp.max(jnp.abs(out - ref))
    # tolerance accounts for the approximate (EUP) reciprocal in the softmax normalizer
    assert jnp.allclose(out, ref, atol=2e-3, rtol=2e-3), f"max abs err = {err}"

    print("KERNEL_OK")
</pallas_src>

<mosaic_0001>
module attributes {stable_mosaic.version = 11 : i64} {
  func.func @_mha_kernel(%arg0: i32, %arg1: i32, %arg2: memref<1x8x32xf32, #tpu.memory_space<vmem>>, %arg3: memref<1x8x32xf32, #tpu.memory_space<vmem>>, %arg4: memref<1x8x32xf32, #tpu.memory_space<vmem>>, %arg5: memref<1x4x8x8xf32, #tpu.memory_space<vmem>>, %arg6: memref<32x32xf32, #tpu.memory_space<vmem>>, %arg7: memref<1x32xf32, #tpu.memory_space<vmem>>, %arg8: memref<32x32xf32, #tpu.memory_space<vmem>>, %arg9: memref<1x32xf32, #tpu.memory_space<vmem>>, %arg10: memref<32x32xf32, #tpu.memory_space<vmem>>, %arg11: memref<1x32xf32, #tpu.memory_space<vmem>>, %arg12: memref<32x32xf32, #tpu.memory_space<vmem>>, %arg13: memref<1x32xf32, #tpu.memory_space<vmem>>, %arg14: memref<1x8x32xf32, #tpu.memory_space<vmem>>, %arg15: memref<4x8x8xf32, #tpu.memory_space<vmem>>, %arg16: memref<4x8x8xf32, #tpu.memory_space<vmem>>) attributes {dimension_semantics = [#tpu.dimension_semantics<parallel>, #tpu.dimension_semantics<arbitrary>], iteration_bounds = array<i64: 2, 1>, scalar_prefetch = 0 : i64, scratch_operands = 2 : i64, tpu.core_type = #tpu.core_type<tc>, window_params = [{transform_indices = @transform_0, window_bounds = array<i64: 1, 8, 32>}, {transform_indices = @transform_1, window_bounds = array<i64: 1, 8, 32>}, {transform_indices = @transform_2, window_bounds = array<i64: 1, 8, 32>}, {transform_indices = @transform_3, window_bounds = array<i64: 1, 4, 8, 8>}, {pipeline_mode = #tpu.pipeline_mode<synchronous>, transform_indices = @transform_4, window_bounds = array<i64: 32, 32>}, {pipeline_mode = #tpu.pipeline_mode<synchronous>, transform_indices = @transform_5, window_bounds = array<i64: 1, 32>}, {pipeline_mode = #tpu.pipeline_mode<synchronous>, transform_indices = @transform_6, window_bounds = array<i64: 32, 32>}, {pipeline_mode = #tpu.pipeline_mode<synchronous>, transform_indices = @transform_7, window_bounds = array<i64: 1, 32>}, {pipeline_mode = #tpu.pipeline_mode<synchronous>, transform_indices = @transform_8, window_bounds = array<i64: 32, 32>}, {pipeline_mode = #tpu.pipeline_mode<synchronous>, transform_indices = @transform_9, window_bounds = array<i64: 1, 32>}, {pipeline_mode = #tpu.pipeline_mode<synchronous>, transform_indices = @transform_10, window_bounds = array<i64: 32, 32>}, {pipeline_mode = #tpu.pipeline_mode<synchronous>, transform_indices = @transform_11, window_bounds = array<i64: 1, 32>}, {transform_indices = @transform_12, window_bounds = array<i64: 1, 8, 32>}]} {
    %c0_i32 = arith.constant 0 : i32
    %0 = arith.cmpi eq, %arg1, %c0_i32 : i32
    %1 = arith.extui %0 : i1 to i32
    %c0_i32_0 = arith.constant 0 : i32
    %2 = arith.cmpi ne, %1, %c0_i32_0 : i32
    scf.if %2 {
      %c0_29 = arith.constant 0 : index
      %c0_30 = arith.constant 0 : index
      %c0_31 = arith.constant 0 : index
      %53 = vector.load %arg3[%c0_29, %c0_30, %c0_31] : memref<1x8x32xf32, #tpu.memory_space<vmem>>, vector<1x8x32xf32>
      %54 = vector.shape_cast %53 : vector<1x8x32xf32> to vector<8x32xf32>
      %c0_32 = arith.constant 0 : index
      %c0_33 = arith.constant 0 : index
      %55 = vector.load %arg8[%c0_32, %c0_33] : memref<32x32xf32, #tpu.memory_space<vmem>>, vector<32x32xf32>
      %cst_34 = arith.constant dense<0.000000e+00> : vector<8x32xf32>
      %56 = tpu.matmul %54, %55, %cst_34 {dimension_numbers = #tpu.dot_dimension_numbers<[1], [0], [0], [1], [0, 0, 1, 1], [], []>} : vector<8x32xf32>, vector<32x32xf32>, vector<8x32xf32> -> vector<8x32xf32>
      %c0_35 = arith.constant 0 : index
      %c0_36 = arith.constant 0 : index
      %57 = vector.load %arg9[%c0_35, %c0_36] : memref<1x32xf32, #tpu.memory_space<vmem>>, vector<1x32xf32>
      %58 = vector.broadcast %57 : vector<1x32xf32> to vector<8x32xf32>
      %59 = arith.addf %56, %58 : vector<8x32xf32>
      %c0_37 = arith.constant 0 : index
      %c0_38 = arith.constant 0 : index
      %c0_39 = arith.constant 0 : index
      %60 = vector.load %arg4[%c0_37, %c0_38, %c0_39] : memref<1x8x32xf32, #tpu.memory_space<vmem>>, vector<1x8x32xf32>
      %61 = vector.shape_cast %60 : vector<1x8x32xf32> to vector<8x32xf32>
      %c0_40 = arith.constant 0 : index
      %c0_41 = arith.constant 0 : index
      %62 = vector.load %arg10[%c0_40, %c0_41] : memref<32x32xf32, #tpu.memory_space<vmem>>, vector<32x32xf32>
      %cst_42 = arith.constant dense<0.000000e+00> : vector<8x32xf32>
      %63 = tpu.matmul %61, %62, %cst_42 {dimension_numbers = #tpu.dot_dimension_numbers<[1], [0], [0], [1], [0, 0, 1, 1], [], []>} : vector<8x32xf32>, vector<32x32xf32>, vector<8x32xf32> -> vector<8x32xf32>
      %c0_43 = arith.constant 0 : index
      %c0_44 = arith.constant 0 : index
      %64 = vector.load %arg11[%c0_43, %c0_44] : memref<1x32xf32, #tpu.memory_space<vmem>>, vector<1x32xf32>
      %65 = vector.broadcast %64 : vector<1x32xf32> to vector<8x32xf32>
      %66 = arith.addf %63, %65 : vector<8x32xf32>
      %67 = vector.extract_strided_slice %59 {offsets = [0, 0], sizes = [8, 8], strides = [1, 1]} : vector<8x32xf32> to vector<8x8xf32>
      %c0_45 = arith.constant 0 : index
      %c0_46 = arith.constant 0 : index
      %c0_47 = arith.constant 0 : index
      %68 = vector.load %arg15[%c0_45, %c0_46, %c0_47] : memref<4x8x8xf32, #tpu.memory_space<vmem>>, vector<1x8x8xf32>
      %69 = vector.shape_cast %68 : vector<1x8x8xf32> to vector<8x8xf32>
      %70 = vector.shape_cast %67 : vector<8x8xf32> to vector<1x8x8xf32>
      tpu.vector_store %arg15[%c0_45, %c0_46, %c0_47], %70 {strides = array<i32>} : memref<4x8x8xf32, #tpu.memory_space<vmem>>, vector<1x8x8xf32>,
      %71 = vector.extract_strided_slice %66 {offsets = [0, 0], sizes = [8, 8], strides = [1, 1]} : vector<8x32xf32> to vector<8x8xf32>
      %c0_48 = arith.constant 0 : index
      %c0_49 = arith.constant 0 : index
      %c0_50 = arith.constant 0 : index
      %72 = vector.load %arg16[%c0_48, %c0_49, %c0_50] : memref<4x8x8xf32, #tpu.memory_space<vmem>>, vector<1x8x8xf32>
      %73 = vector.shape_cast %72 : vector<1x8x8xf32> to vector<8x8xf32>
      %74 = vector.shape_cast %71 : vector<8x8xf32> to vector<1x8x8xf32>
      tpu.vector_store %arg16[%c0_48, %c0_49, %c0_50], %74 {strides = array<i32>} : memref<4x8x8xf32, #tpu.memory_space<vmem>>, vector<1x8x8xf32>,
      %75 = vector.extract_strided_slice %59 {offsets = [0, 8], sizes = [8, 8], strides = [1, 1]} : vector<8x32xf32> to vector<8x8xf32>
      %c1 = arith.constant 1 : index
      %c0_51 = arith.constant 0 : index
      %c0_52 = arith.constant 0 : index
      %76 = vector.load %arg15[%c1, %c0_51, %c0_52] : memref<4x8x8xf32, #tpu.memory_space<vmem>>, vector<1x8x8xf32>
      %77 = vector.shape_cast %76 : vector<1x8x8xf32> to vector<8x8xf32>
      %78 = vector.shape_cast %75 : vector<8x8xf32> to vector<1x8x8xf32>
      tpu.vector_store %arg15[%c1, %c0_51, %c0_52], %78 {strides = array<i32>} : memref<4x8x8xf32, #tpu.memory_space<vmem>>, vector<1x8x8xf32>,
      %79 = vector.extract_strided_slice %66 {offsets = [0, 8], sizes = [8, 8], strides = [1, 1]} : vector<8x32xf32> to vector<8x8xf32>
      %c1_53 = arith.constant 1 : index
      %c0_54 = arith.constant 0 : index
      %c0_55 = arith.constant 0 : index
      %80 = vector.load %arg16[%c1_53, %c0_54, %c0_55] : memref<4x8x8xf32, #tpu.memory_space<vmem>>, vector<1x8x8xf32>
      %81 = vector.shape_cast %80 : vector<1x8x8xf32> to vector<8x8xf32>
      %82 = vector.shape_cast %79 : vector<8x8xf32> to vector<1x8x8xf32>
      tpu.vector_store %arg16[%c1_53, %c0_54, %c0_55], %82 {strides = array<i32>} : memref<4x8x8xf32, #tpu.memory_space<vmem>>, vector<1x8x8xf32>,
      %83 = vector.extract_strided_slice %59 {offsets = [0, 16], sizes = [8, 8], strides = [1, 1]} : vector<8x32xf32> to vector<8x8xf32>
      %c2 = arith.constant 2 : index
      %c0_56 = arith.constant 0 : index
      %c0_57 = arith.constant 0 : index
      %84 = vector.load %arg15[%c2, %c0_56, %c0_57] : memref<4x8x8xf32, #tpu.memory_space<vmem>>, vector<1x8x8xf32>
      %85 = vector.shape_cast %84 : vector<1x8x8xf32> to vector<8x8xf32>
      %86 = vector.shape_cast %83 : vector<8x8xf32> to vector<1x8x8xf32>
      tpu.vector_store %arg15[%c2, %c0_56, %c0_57], %86 {strides = array<i32>} : memref<4x8x8xf32, #tpu.memory_space<vmem>>, vector<1x8x8xf32>,
      %87 = vector.extract_strided_slice %66 {offsets = [0, 16], sizes = [8, 8], strides = [1, 1]} : vector<8x32xf32> to vector<8x8xf32>
      %c2_58 = arith.constant 2 : index
      %c0_59 = arith.constant 0 : index
      %c0_60 = arith.constant 0 : index
      %88 = vector.load %arg16[%c2_58, %c0_59, %c0_60] : memref<4x8x8xf32, #tpu.memory_space<vmem>>, vector<1x8x8xf32>
      %89 = vector.shape_cast %88 : vector<1x8x8xf32> to vector<8x8xf32>
      %90 = vector.shape_cast %87 : vector<8x8xf32> to vector<1x8x8xf32>
      tpu.vector_store %arg16[%c2_58, %c0_59, %c0_60], %90 {strides = array<i32>} : memref<4x8x8xf32, #tpu.memory_space<vmem>>, vector<1x8x8xf32>,
      %91 = vector.extract_strided_slice %59 {offsets = [0, 24], sizes = [8, 8], strides = [1, 1]} : vector<8x32xf32> to vector<8x8xf32>
      %c3 = arith.constant 3 : index
      %c0_61 = arith.constant 0 : index
      %c0_62 = arith.constant 0 : index
      %92 = vector.load %arg15[%c3, %c0_61, %c0_62] : memref<4x8x8xf32, #tpu.memory_space<vmem>>, vector<1x8x8xf32>
      %93 = vector.shape_cast %92 : vector<1x8x8xf32> to vector<8x8xf32>
      %94 = vector.shape_cast %91 : vector<8x8xf32> to vector<1x8x8xf32>
      tpu.vector_store %arg15[%c3, %c0_61, %c0_62], %94 {strides = array<i32>} : memref<4x8x8xf32, #tpu.memory_space<vmem>>, vector<1x8x8xf32>,
      %95 = vector.extract_strided_slice %66 {offsets = [0, 24], sizes = [8, 8], strides = [1, 1]} : vector<8x32xf32> to vector<8x8xf32>
      %c3_63 = arith.constant 3 : index
      %c0_64 = arith.constant 0 : index
      %c0_65 = arith.constant 0 : index
      %96 = vector.load %arg16[%c3_63, %c0_64, %c0_65] : memref<4x8x8xf32, #tpu.memory_space<vmem>>, vector<1x8x8xf32>
      %97 = vector.shape_cast %96 : vector<1x8x8xf32> to vector<8x8xf32>
      %98 = vector.shape_cast %95 : vector<8x8xf32> to vector<1x8x8xf32>
      tpu.vector_store %arg16[%c3_63, %c0_64, %c0_65], %98 {strides = array<i32>} : memref<4x8x8xf32, #tpu.memory_space<vmem>>, vector<1x8x8xf32>,
    } else {
    }
    %c0 = arith.constant 0 : index
    %c0_1 = arith.constant 0 : index
    %c0_2 = arith.constant 0 : index
    %3 = vector.load %arg2[%c0, %c0_1, %c0_2] : memref<1x8x32xf32, #tpu.memory_space<vmem>>, vector<1x8x32xf32>
    %4 = vector.shape_cast %3 : vector<1x8x32xf32> to vector<8x32xf32>
    %c0_3 = arith.constant 0 : index
    %c0_4 = arith.constant 0 : index
    %5 = vector.load %arg6[%c0_3, %c0_4] : memref<32x32xf32, #tpu.memory_space<vmem>>, vector<32x32xf32>
    %cst = arith.constant dense<0.000000e+00> : vector<8x32xf32>
    %6 = tpu.matmul %4, %5, %cst {dimension_numbers = #tpu.dot_dimension_numbers<[1], [0], [0], [1], [0, 0, 1, 1], [], []>} : vector<8x32xf32>, vector<32x32xf32>, vector<8x32xf32> -> vector<8x32xf32>
    %c0_5 = arith.constant 0 : index
    %c0_6 = arith.constant 0 : index
    %7 = vector.load %arg7[%c0_5, %c0_6] : memref<1x32xf32, #tpu.memory_space<vmem>>, vector<1x32xf32>
    %8 = vector.broadcast %7 : vector<1x32xf32> to vector<8x32xf32>
    %9 = arith.addf %6, %8 : vector<8x32xf32>
    %10 = vector.extract_strided_slice %9 {offsets = [0, 0], sizes = [8, 8], strides = [1, 1]} : vector<8x32xf32> to vector<8x8xf32>
    %11 = vector.extract_strided_slice %9 {offsets = [0, 8], sizes = [8, 8], strides = [1, 1]} : vector<8x32xf32> to vector<8x8xf32>
    %12 = vector.extract_strided_slice %9 {offsets = [0, 16], sizes = [8, 8], strides = [1, 1]} : vector<8x32xf32> to vector<8x8xf32>
    %13 = vector.extract_strided_slice %9 {offsets = [0, 24], sizes = [8, 8], strides = [1, 1]} : vector<8x32xf32> to vector<8x8xf32>
    %14 = vector.shape_cast %10 : vector<8x8xf32> to vector<1x8x8xf32>
    %15 = vector.shape_cast %11 : vector<8x8xf32> to vector<1x8x8xf32>
    %16 = vector.shape_cast %12 : vector<8x8xf32> to vector<1x8x8xf32>
    %17 = vector.shape_cast %13 : vector<8x8xf32> to vector<1x8x8xf32>
    %18 = tpu.concatenate %14, %15, %16, %17 in 0 : vector<1x8x8xf32>, vector<1x8x8xf32>, vector<1x8x8xf32>, vector<1x8x8xf32> -> vector<4x8x8xf32>
    %c0_7 = arith.constant 0 : index
    %c0_8 = arith.constant 0 : index
    %c0_9 = arith.constant 0 : index
    %19 = vector.load %arg15[%c0_7, %c0_8, %c0_9] : memref<4x8x8xf32, #tpu.memory_space<vmem>>, vector<4x8x8xf32>
    %c0_10 = arith.constant 0 : index
    %c0_11 = arith.constant 0 : index
    %c0_12 = arith.constant 0 : index
    %20 = vector.load %arg16[%c0_10, %c0_11, %c0_12] : memref<4x8x8xf32, #tpu.memory_space<vmem>>, vector<4x8x8xf32>
    "tpu.trace_start"() <{level = 10 : i32, message = "hqd,hkd->hqk"}> : () -> ()
    %cst_13 = arith.constant dense<0.000000e+00> : vector<4x8x8xf32>
    %21 = tpu.matmul %18, %19, %cst_13 {dimension_numbers = #tpu.dot_dimension_numbers<[2], [2], [1], [1], [0, 0, 0, 1, 1, 1], [0], [0]>} : vector<4x8x8xf32>, vector<4x8x8xf32>, vector<4x8x8xf32> -> vector<4x8x8xf32>
    "tpu.trace_stop"() : () -> ()
    %c0_14 = arith.constant 0 : index
    %c0_15 = arith.constant 0 : index
    %c0_16 = arith.constant 0 : index
    %c0_17 = arith.constant 0 : index
    %22 = vector.load %arg5[%c0_14, %c0_15, %c0_16, %c0_17] : memref<1x4x8x8xf32, #tpu.memory_space<vmem>>, vector<1x4x8x8xf32>
    %23 = vector.shape_cast %22 : vector<1x4x8x8xf32> to vector<4x8x8xf32>
    %24 = arith.addf %21, %23 : vector<4x8x8xf32>
    %cst_18 = arith.constant dense<0xFF800000> : vector<4x8xf32>
    %25 = vector.multi_reduction <maximumf>, %24, %cst_18 [2] : vector<4x8x8xf32> to vector<4x8xf32>
    %26 = vector.shape_cast %25 : vector<4x8xf32> to vector<4x8x1xf32>
    %27 = vector.broadcast %26 : vector<4x8x1xf32> to vector<4x8x8xf32>
    %28 = arith.subf %24, %27 : vector<4x8x8xf32>
    %29 = math.exp %28 : vector<4x8x8xf32>
    %cst_19 = arith.constant dense<0.000000e+00> : vector<4x8xf32>
    %30 = vector.multi_reduction <add>, %29, %cst_19 [2] : vector<4x8x8xf32> to vector<4x8xf32>
    %31 = vector.shape_cast %30 : vector<4x8xf32> to vector<4x8x1xf32>
    %32 = tpu.reciprocal %31 {approx = true} : vector<4x8x1xf32> -> vector<4x8x1xf32>
    %33 = vector.broadcast %32 : vector<4x8x1xf32> to vector<4x8x8xf32>
    %34 = arith.mulf %29, %33 : vector<4x8x8xf32>
    "tpu.trace_start"() <{level = 10 : i32, message = "hqk,hkd->hqd"}> : () -> ()
    %cst_20 = arith.constant dense<0.000000e+00> : vector<4x8x8xf32>
    %35 = tpu.matmul %34, %20, %cst_20 {dimension_numbers = #tpu.dot_dimension_numbers<[2], [1], [1], [2], [0, 0, 0, 1, 1, 2], [0], [0]>} : vector<4x8x8xf32>, vector<4x8x8xf32>, vector<4x8x8xf32> -> vector<4x8x8xf32>
    "tpu.trace_stop"() : () -> ()
    %36 = vector.extract_strided_slice %35 {offsets = [0, 0, 0], sizes = [1, 8, 8], strides = [1, 1, 1]} : vector<4x8x8xf32> to vector<1x8x8xf32>
    %37 = vector.shape_cast %36 : vector<1x8x8xf32> to vector<8x8xf32>
    %38 = vector.extract_strided_slice %35 {offsets = [1, 0, 0], sizes = [1, 8, 8], strides = [1, 1, 1]} : vector<4x8x8xf32> to vector<1x8x8xf32>
    %39 = vector.shape_cast %38 : vector<1x8x8xf32> to vector<8x8xf32>
    %40 = vector.extract_strided_slice %35 {offsets = [2, 0, 0], sizes = [1, 8, 8], strides = [1, 1, 1]} : vector<4x8x8xf32> to vector<1x8x8xf32>
    %41 = vector.shape_cast %40 : vector<1x8x8xf32> to vector<8x8xf32>
    %42 = vector.extract_strided_slice %35 {offsets = [3, 0, 0], sizes = [1, 8, 8], strides = [1, 1, 1]} : vector<4x8x8xf32> to vector<1x8x8xf32>
    %43 = vector.shape_cast %42 : vector<1x8x8xf32> to vector<8x8xf32>
    %44 = tpu.concatenate %37, %39, %41, %43 in 1 : vector<8x8xf32>, vector<8x8xf32>, vector<8x8xf32>, vector<8x8xf32> -> vector<8x32xf32>
    %c0_21 = arith.constant 0 : index
    %c0_22 = arith.constant 0 : index
    %45 = vector.load %arg12[%c0_21, %c0_22] : memref<32x32xf32, #tpu.memory_space<vmem>>, vector<32x32xf32>
    %cst_23 = arith.constant dense<0.000000e+00> : vector<8x32xf32>
    %46 = tpu.matmul %44, %45, %cst_23 {dimension_numbers = #tpu.dot_dimension_numbers<[1], [0], [0], [1], [0, 0, 1, 1], [], []>} : vector<8x32xf32>, vector<32x32xf32>, vector<8x32xf32> -> vector<8x32xf32>
    %c0_24 = arith.constant 0 : index
    %c0_25 = arith.constant 0 : index
    %47 = vector.load %arg13[%c0_24, %c0_25] : memref<1x32xf32, #tpu.memory_space<vmem>>, vector<1x32xf32>
    %48 = vector.broadcast %47 : vector<1x32xf32> to vector<8x32xf32>
    %49 = arith.addf %46, %48 : vector<8x32xf32>
    %c0_26 = arith.constant 0 : index
    %c0_27 = arith.constant 0 : index
    %c0_28 = arith.constant 0 : index
    %50 = vector.load %arg14[%c0_26, %c0_27, %c0_28] : memref<1x8x32xf32, #tpu.memory_space<vmem>>, vector<1x8x32xf32>
    %51 = vector.shape_cast %50 : vector<1x8x32xf32> to vector<8x32xf32>
    %52 = vector.shape_cast %49 : vector<8x32xf32> to vector<1x8x32xf32>
    tpu.vector_store %arg14[%c0_26, %c0_27, %c0_28], %52 {strides = array<i32>} : memref<1x8x32xf32, #tpu.memory_space<vmem>>, vector<1x8x32xf32>,
    return
  }
  func.func @transform_0(%arg0: i32, %arg1: i32) -> (i32, i32, i32) {
    %c0_i32 = arith.constant 0 : i32
    %c0_i32_0 = arith.constant 0 : i32
    return %arg0, %arg1, %c0_i32 : i32, i32, i32
  }
  func.func @transform_1(%arg0: i32, %arg1: i32) -> (i32, i32, i32) {
    %c0_i32 = arith.constant 0 : i32
    %c0_i32_0 = arith.constant 0 : i32
    %c0_i32_1 = arith.constant 0 : i32
    return %arg0, %c0_i32, %c0_i32_0 : i32, i32, i32
  }
  func.func @transform_2(%arg0: i32, %arg1: i32) -> (i32, i32, i32) {
    %c0_i32 = arith.constant 0 : i32
    %c0_i32_0 = arith.constant 0 : i32
    %c0_i32_1 = arith.constant 0 : i32
    return %arg0, %c0_i32, %c0_i32_0 : i32, i32, i32
  }
  func.func @transform_3(%arg0: i32, %arg1: i32) -> (i32, i32, i32, i32) {
    %c0_i32 = arith.constant 0 : i32
    %c0_i32_0 = arith.constant 0 : i32
    %c0_i32_1 = arith.constant 0 : i32
    return %arg0, %c0_i32, %arg1, %c0_i32_0 : i32, i32, i32, i32
  }
  func.func @transform_4(%arg0: i32, %arg1: i32) -> (i32, i32) {
    %c0_i32 = arith.constant 0 : i32
    %c0_i32_0 = arith.constant 0 : i32
    %c0_i32_1 = arith.constant 0 : i32
    return %c0_i32, %c0_i32_0 : i32, i32
  }
  func.func @transform_5(%arg0: i32, %arg1: i32) -> (i32, i32) {
    %c0_i32 = arith.constant 0 : i32
    %c0_i32_0 = arith.constant 0 : i32
    %c0_i32_1 = arith.constant 0 : i32
    return %c0_i32, %c0_i32_0 : i32, i32
  }
  func.func @transform_6(%arg0: i32, %arg1: i32) -> (i32, i32) {
    %c0_i32 = arith.constant 0 : i32
    %c0_i32_0 = arith.constant 0 : i32
    %c0_i32_1 = arith.constant 0 : i32
    return %c0_i32, %c0_i32_0 : i32, i32
  }
  func.func @transform_7(%arg0: i32, %arg1: i32) -> (i32, i32) {
    %c0_i32 = arith.constant 0 : i32
    %c0_i32_0 = arith.constant 0 : i32
    %c0_i32_1 = arith.constant 0 : i32
    return %c0_i32, %c0_i32_0 : i32, i32
  }
  func.func @transform_8(%arg0: i32, %arg1: i32) -> (i32, i32) {
    %c0_i32 = arith.constant 0 : i32
    %c0_i32_0 = arith.constant 0 : i32
    %c0_i32_1 = arith.constant 0 : i32
    return %c0_i32, %c0_i32_0 : i32, i32
  }
  func.func @transform_9(%arg0: i32, %arg1: i32) -> (i32, i32) {
    %c0_i32 = arith.constant 0 : i32
    %c0_i32_0 = arith.constant 0 : i32
    %c0_i32_1 = arith.constant 0 : i32
    return %c0_i32, %c0_i32_0 : i32, i32
  }
  func.func @transform_10(%arg0: i32, %arg1: i32) -> (i32, i32) {
    %c0_i32 = arith.constant 0 : i32
    %c0_i32_0 = arith.constant 0 : i32
    %c0_i32_1 = arith.constant 0 : i32
    return %c0_i32, %c0_i32_0 : i32, i32
  }
  func.func @transform_11(%arg0: i32, %arg1: i32) -> (i32, i32) {
    %c0_i32 = arith.constant 0 : i32
    %c0_i32_0 = arith.constant 0 : i32
    %c0_i32_1 = arith.constant 0 : i32
    return %c0_i32, %c0_i32_0 : i32, i32
  }
  func.func @transform_12(%arg0: i32, %arg1: i32) -> (i32, i32, i32) {
    %c0_i32 = arith.constant 0 : i32
    %c0_i32_0 = arith.constant 0 : i32
    return %arg0, %arg1, %c0_i32 : i32, i32, i32
  }
}

</mosaic_0001>

<llo_original>
// kernel: tpu_custom_call.1
$region0: #{tpu_custom_call.1}
  #allocation0 [shape = 'u32[]', space=smem, size = 0x4, offset = 0x4, fixed_abs, tag = 'smem constant byte address 0x4 - core index']
  #allocation1 [shape = 'u32[72,128]{1,0:T(1,128)}', space=vmem, size = 0x9000, scoped, tag = 'internal scratch']
  #allocation2 [shape = 'f32[4,8,8]{2,1,0:T(8,128)}', space=vmem, size = 0x4000, scoped, tag = 'scratch operand']
  #allocation3 [shape = 'f32[4,8,8]{2,1,0:T(8,128)}', space=vmem, size = 0x4000, scoped, tag = 'scratch operand']
  %s0 = inlined_call_operand.hbm [shape: f32[2,8,32], index: 0, kind: input, shape index: {}]
  %s1 = inlined_call_operand.hbm [shape: f32[2,8,32], index: 1, kind: input, shape index: {}]
  %s2 = inlined_call_operand.hbm [shape: f32[2,8,32], index: 2, kind: input, shape index: {}]
  %s3 = inlined_call_operand.hbm [shape: f32[2,4,8,8], index: 3, kind: input, shape index: {}]
  %s4 = inlined_call_operand.hbm [shape: f32[32,32], index: 4, kind: input, shape index: {}]
  %s5 = inlined_call_operand.vmem [shape: f32[1,32], index: 5, kind: input, shape index: {}]
  %s6 = inlined_call_operand.hbm [shape: f32[32,32], index: 6, kind: input, shape index: {}]
  %s7 = inlined_call_operand.vmem [shape: f32[1,32], index: 7, kind: input, shape index: {}]
  %s8 = inlined_call_operand.hbm [shape: f32[32,32], index: 8, kind: input, shape index: {}]
  %s9 = inlined_call_operand.vmem [shape: f32[1,32], index: 9, kind: input, shape index: {}]
  %s10 = inlined_call_operand.hbm [shape: f32[32,32], index: 10, kind: input, shape index: {}]
  %s11 = inlined_call_operand.vmem [shape: f32[1,32], index: 11, kind: input, shape index: {}]
  %s12 = inlined_call_operand.hbm [shape: f32[2,8,32], index: 12, kind: output, shape index: {}]
  %s13 = sld [smem:[#allocation0]]
  $region117: #{tpu_custom_call.1} parent=0
    _
  %s15 = ssub.s32 1, %s13
  %s16 = scalar_select 0, %s15, %s13
  $region1: #{tpu_custom_call.1} parent=0
    #allocation4 [shape = 'u8[8192]{0}', space=vmem, size = 0x2000, scoped, tag = 'input window, operand 0']
    #allocation5 [shape = 's32[2]{0}', space=sflag, size = 0x8, scoped, tag = 'scoped memory for tpu_custom_call.1']
    #allocation6 [shape = 's32[2]{0}', space=sflag, size = 0x8, scoped, tag = 'scoped memory for tpu_custom_call.1']
    #allocation7 [shape = 'u8[8192]{0}', space=vmem, size = 0x2000, scoped, tag = 'input window, operand 1']
    #allocation8 [shape = 's32[2]{0}', space=sflag, size = 0x8, scoped, tag = 'scoped memory for tpu_custom_call.1']
    #allocation9 [shape = 'u8[8192]{0}', space=vmem, size = 0x2000, scoped, tag = 'input window, operand 2']
    #allocation10 [shape = 'u8[32768]{0}', space=vmem, size = 0x8000, scoped, tag = 'input window, operand 3']
    #allocation11 [shape = 's32[2]{0}', space=sflag, size = 0x8, scoped, tag = 'scoped memory for tpu_custom_call.1']
    #allocation12 [shape = 'u8[16384]{0}', space=vmem, size = 0x4000, scoped, tag = 'input window, operand 4, single buffered']
    #allocation13 [shape = 'u8[16384]{0}', space=vmem, size = 0x4000, scoped, tag = 'input window, operand 6, single buffered']
    #allocation14 [shape = 's32[1]{0}', space=sflag, size = 0x4, scoped, tag = 'scoped memory for tpu_custom_call.1']
    #allocation15 [shape = 'u8[16384]{0}', space=vmem, size = 0x4000, scoped, tag = 'input window, operand 8, single buffered']
    #allocation16 [shape = 'u8[16384]{0}', space=vmem, size = 0x4000, scoped, tag = 'input window, operand 10, single buffered']
    #allocation17 [shape = 's32[1]{0}', space=sflag, size = 0x4, scoped, tag = 'scoped memory for tpu_custom_call.1']
    #allocation18 [shape = 'u8[8192]{0}', space=vmem, size = 0x2000, scoped, tag = 'output window, operand 0']
    %17 = vsyncpa [#allocation5], 0
    %s18 = scalar_lea.sflag [#allocation5], 1
    %19 = vsyncpa %s18, 0
    %20 = vsyncpa [#allocation8], 0
    %s21 = scalar_lea.sflag [#allocation8], 1
    %22 = vsyncpa %s21, 0
    %23 = vsyncpa [#allocation11], 0
    %s24 = scalar_lea.sflag [#allocation11], 1
    %25 = vsyncpa %s24, 0
    %26 = vsyncpa [#allocation14], 0
    %27 = vsyncpa [#allocation17], 0
    %28 = vsyncpa [#allocation6], 0
    %s29 = scalar_lea.sflag [#allocation6], 1
    %30 = vsyncpa %s29, 0
    loop: start=0, step=1, limit=4
    $region2: #{tpu_custom_call.1} parent=1 // loop_pre_header
      _
    $region3: #{tpu_custom_call.1} parent=1 // loop_header
      %s32 = sphi 0, %s36
      %p33 = scmp.ge.s32.totalorder %s32, 4
      %s39 = sphi 0, %s51
      %s40 = sphi 0, %s47
      %s41 = sphi 0, %s39
      %s42 = sphi 0, %s40
      %s43 = sphi 0, %s41
      %s44 = sphi 0, %s42
      %s56 = sphi 0, %s58
      %s59 = sphi 0, %s56
      %s60 = sphi 0, %s59
      %s76 = sphi 0, %s60
      %s82 = sphi 0, %s84
      %s85 = sphi 0, %s82
      %s86 = sphi 0, %s85
      %s102 = sphi 0, %s86
      %s108 = sphi 0, %s110
      %s111 = sphi 0, %s108
      %s112 = sphi 0, %s111
      %s128 = sphi 0, %s112
      %s136 = sphi 0, %s138
      %s139 = sphi 0, %s136
      %s140 = sphi 0, %s139
      %s156 = sphi 0, %s140
      %s160 = sphi 0, %s160
      %s162 = sphi 0, %s160
      %s163 = sphi 0, %s162
      %s177 = sphi 0, %s163
      %s181 = sphi 0, %s181
      %s183 = sphi 0, %s181
      %s184 = sphi 0, %s183
      %s198 = sphi 0, %s184
      %s202 = sphi 0, %s202
      %s204 = sphi 0, %s202
      %s205 = sphi 0, %s204
      %s219 = sphi 0, %s205
      %s223 = sphi 0, %s223
      %s225 = sphi 0, %s223
      %s226 = sphi 0, %s225
      %s240 = sphi 0, %s226
      %s244 = sphi 0, %s244
      %s246 = sphi 0, %s244
      %s247 = sphi 0, %s246
      %s261 = sphi 0, %s247
      %s265 = sphi 0, %s265
      %s267 = sphi 0, %s265
      %s268 = sphi 0, %s267
      %s282 = sphi 0, %s268
      %s286 = sphi 0, %s286
      %s288 = sphi 0, %s286
      %s289 = sphi 0, %s288
      %s303 = sphi 0, %s289
      %s307 = sphi 0, %s307
      %s309 = sphi 0, %s307
      %s310 = sphi 0, %s309
      %s324 = sphi 0, %s310
      %s332 = sphi 0, %s334
      %s335 = sphi 0, %s332
      %s336 = sphi 0, %s335
      %s352 = sphi 0, %s336
    $region4: #{tpu_custom_call.1} parent=1 // loop_header_branch
      %35 = sbr.rel (%p33) target = $region8
    $region5: #{tpu_custom_call.1} parent=1 // loop_body
      %s37 = ssub.s32 %s32, 1
      %s38 = ssub.s32 %s32, 2
      %s45 = sadd.s32 1, %s40
      %p46 = scmp.ge.s32.totalorder %s45, 1
      %s47 = scalar_select %p46, 0, %s45
      %s48 = sadd.s32 1, %s39
      %s49 = scalar_select %p46, %s48, %s39
      %p50 = scmp.ge.s32.totalorder %s49, 2
      %s51 = scalar_select %p50, 0, %s49
      %s52 = ssub.s32 %s39, %s51
      %s53 = ssub.s32 %s40, %s47
      %s54 = sor.u32 %s52, %s53
      %p55 = scmp.eq.s32.totalorder %s54, 0
      %s57 = sadd.s32 %s56, 1
      %s58 = scalar_select %p55, %s56, %s57
      %p61 = pneg %p55
      %p62 = scmp.eq.s32.totalorder %s32, 1
      %p63 = por %p61, %p62
      %p64 = scmp.ne.s32.totalorder %s56, %s59
      %p65 = scmp.eq.s32.totalorder %s32, 0
      %p66 = por %p64, %p65
      %p67 = scmp.ne.s32.totalorder %s56, %s59
      %p68 = scmp.eq.s32.totalorder %s37, 1
      %p69 = por %p67, %p68
      %p70 = scmp.ne.s32.totalorder %s59, %s60
      %p71 = scmp.eq.s32.totalorder %s37, 0
      %p72 = por %p70, %p71
      %p73 = scmp.ne.s32.totalorder %s59, %s60
      %p74 = scmp.eq.s32.totalorder %s38, 1
      %p75 = por %p73, %p74
      %p77 = scmp.ne.s32.totalorder %s60, %s76
      %p78 = scmp.eq.s32.totalorder %s38, 0
      %p79 = por %p77, %p78
      %s80 = ssub.s32 %s39, %s51
      %p81 = scmp.eq.s32.totalorder %s80, 0
      %s83 = sadd.s32 %s82, 1
      %s84 = scalar_select %p81, %s82, %s83
      %p87 = pneg %p81
      %p88 = scmp.eq.s32.totalorder %s32, 1
      %p89 = por %p87, %p88
      %p90 = scmp.ne.s32.totalorder %s82, %s85
      %p91 = scmp.eq.s32.totalorder %s32, 0
      %p92 = por %p90, %p91
      %p93 = scmp.ne.s32.totalorder %s82, %s85
      %p94 = scmp.eq.s32.totalorder %s37, 1
      %p95 = por %p93, %p94
      %p96 = scmp.ne.s32.totalorder %s85, %s86
      %p97 = scmp.eq.s32.totalorder %s37, 0
      %p98 = por %p96, %p97
      %p99 = scmp.ne.s32.totalorder %s85, %s86
      %p100 = scmp.eq.s32.totalorder %s38, 1
      %p101 = por %p99, %p100
      %p103 = scmp.ne.s32.totalorder %s86, %s102
      %p104 = scmp.eq.s32.totalorder %s38, 0
      %p105 = por %p103, %p104
      %s106 = ssub.s32 %s39, %s51
      %p107 = scmp.eq.s32.totalorder %s106, 0
      %s109 = sadd.s32 %s108, 1
      %s110 = scalar_select %p107, %s108, %s109
      %p113 = pneg %p107
      %p114 = scmp.eq.s32.totalorder %s32, 1
      %p115 = por %p113, %p114
      %p116 = scmp.ne.s32.totalorder %s108, %s111
      %p117 = scmp.eq.s32.totalorder %s32, 0
      %p118 = por %p116, %p117
      %p119 = scmp.ne.s32.totalorder %s108, %s111
      %p120 = scmp.eq.s32.totalorder %s37, 1
      %p121 = por %p119, %p120
      %p122 = scmp.ne.s32.totalorder %s111, %s112
      %p123 = scmp.eq.s32.totalorder %s37, 0
      %p124 = por %p122, %p123
      %p125 = scmp.ne.s32.totalorder %s111, %s112
      %p126 = scmp.eq.s32.totalorder %s38, 1
      %p127 = por %p125, %p126
      %p129 = scmp.ne.s32.totalorder %s112, %s128
      %p130 = scmp.eq.s32.totalorder %s38, 0
      %p131 = por %p129, %p130
      %s132 = ssub.s32 %s39, %s51
      %s133 = ssub.s32 %s40, %s47
      %s134 = sor.u32 %s132, %s133
      %p135 = scmp.eq.s32.totalorder %s134, 0
      %s137 = sadd.s32 %s136, 1
      %s138 = scalar_select %p135, %s136, %s137
      %p141 = pneg %p135
      %p142 = scmp.eq.s32.totalorder %s32, 1
      %p143 = por %p141, %p142
      %p144 = scmp.ne.s32.totalorder %s136, %s139
      %p145 = scmp.eq.s32.totalorder %s32, 0
      %p146 = por %p144, %p145
      %p147 = scmp.ne.s32.totalorder %s136, %s139
      %p148 = scmp.eq.s32.totalorder %s37, 1
      %p149 = por %p147, %p148
      %p150 = scmp.ne.s32.totalorder %s139, %s140
      %p151 = scmp.eq.s32.totalorder %s37, 0
      %p152 = por %p150, %p151
      %p153 = scmp.ne.s32.totalorder %s139, %s140
      %p154 = scmp.eq.s32.totalorder %s38, 1
      %p155 = por %p153, %p154
      %p157 = scmp.ne.s32.totalorder %s140, %s156
      %p158 = scmp.eq.s32.totalorder %s38, 0
      %p159 = por %p157, %p158
      %s161 = sadd.s32 %s160, 1
      %p164 = scmp.eq.s32.totalorder %s32, 1
      %p165 = scmp.ne.s32.totalorder %s160, %s162
      %p166 = scmp.eq.s32.totalorder %s32, 0
      %p167 = por %p165, %p166
      %p168 = scmp.ne.s32.totalorder %s160, %s162
      %p169 = scmp.eq.s32.totalorder %s37, 1
      %p170 = por %p168, %p169
      %p171 = scmp.ne.s32.totalorder %s162, %s163
      %p172 = scmp.eq.s32.totalorder %s37, 0
      %p173 = por %p171, %p172
      %p174 = scmp.ne.s32.totalorder %s162, %s163
      %p175 = scmp.eq.s32.totalorder %s38, 1
      %p176 = por %p174, %p175
      %p178 = scmp.ne.s32.totalorder %s163, %s177
      %p179 = scmp.eq.s32.totalorder %s38, 0
      %p180 = por %p178, %p179
      %s182 = sadd.s32 %s181, 1
      %p185 = scmp.eq.s32.totalorder %s32, 1
      %p186 = scmp.ne.s32.totalorder %s181, %s183
      %p187 = scmp.eq.s32.totalorder %s32, 0
      %p188 = por %p186, %p187
      %p189 = scmp.ne.s32.totalorder %s181, %s183
      %p190 = scmp.eq.s32.totalorder %s37, 1
      %p191 = por %p189, %p190
      %p192 = scmp.ne.s32.totalorder %s183, %s184
      %p193 = scmp.eq.s32.totalorder %s37, 0
      %p194 = por %p192, %p193
      %p195 = scmp.ne.s32.totalorder %s183, %s184
      %p196 = scmp.eq.s32.totalorder %s38, 1
      %p197 = por %p195, %p196
      %p199 = scmp.ne.s32.totalorder %s184, %s198
      %p200 = scmp.eq.s32.totalorder %s38, 0
      %p201 = por %p199, %p200
      %s203 = sadd.s32 %s202, 1
      %p206 = scmp.eq.s32.totalorder %s32, 1
      %p207 = scmp.ne.s32.totalorder %s202, %s204
      %p208 = scmp.eq.s32.totalorder %s32, 0
      %p209 = por %p207, %p208
      %p210 = scmp.ne.s32.totalorder %s202, %s204
      %p211 = scmp.eq.s32.totalorder %s37, 1
      %p212 = por %p210, %p211
      %p213 = scmp.ne.s32.totalorder %s204, %s205
      %p214 = scmp.eq.s32.totalorder %s37, 0
      %p215 = por %p213, %p214
      %p216 = scmp.ne.s32.totalorder %s204, %s205
      %p217 = scmp.eq.s32.totalorder %s38, 1
      %p218 = por %p216, %p217
      %p220 = scmp.ne.s32.totalorder %s205, %s219
      %p221 = scmp.eq.s32.totalorder %s38, 0
      %p222 = por %p220, %p221
      %s224 = sadd.s32 %s223, 1
      %p227 = scmp.eq.s32.totalorder %s32, 1
      %p228 = scmp.ne.s32.totalorder %s223, %s225
      %p229 = scmp.eq.s32.totalorder %s32, 0
      %p230 = por %p228, %p229
      %p231 = scmp.ne.s32.totalorder %s223, %s225
      %p232 = scmp.eq.s32.totalorder %s37, 1
      %p233 = por %p231, %p232
      %p234 = scmp.ne.s32.totalorder %s225, %s226
      %p235 = scmp.eq.s32.totalorder %s37, 0
      %p236 = por %p234, %p235
      %p237 = scmp.ne.s32.totalorder %s225, %s226
      %p238 = scmp.eq.s32.totalorder %s38, 1
      %p239 = por %p237, %p238
      %p241 = scmp.ne.s32.totalorder %s226, %s240
      %p242 = scmp.eq.s32.totalorder %s38, 0
      %p243 = por %p241, %p242
      %s245 = sadd.s32 %s244, 1
      %p248 = scmp.eq.s32.totalorder %s32, 1
      %p249 = scmp.ne.s32.totalorder %s244, %s246
      %p250 = scmp.eq.s32.totalorder %s32, 0
      %p251 = por %p249, %p250
      %p252 = scmp.ne.s32.totalorder %s244, %s246
      %p253 = scmp.eq.s32.totalorder %s37, 1
      %p254 = por %p252, %p253
      %p255 = scmp.ne.s32.totalorder %s246, %s247
      %p256 = scmp.eq.s32.totalorder %s37, 0
      %p257 = por %p255, %p256
      %p258 = scmp.ne.s32.totalorder %s246, %s247
      %p259 = scmp.eq.s32.totalorder %s38, 1
      %p260 = por %p258, %p259
      %p262 = scmp.ne.s32.totalorder %s247, %s261
      %p263 = scmp.eq.s32.totalorder %s38, 0
      %p264 = por %p262, %p263
      %s266 = sadd.s32 %s265, 1
      %p269 = scmp.eq.s32.totalorder %s32, 1
      %p270 = scmp.ne.s32.totalorder %s265, %s267
      %p271 = scmp.eq.s32.totalorder %s32, 0
      %p272 = por %p270, %p271
      %p273 = scmp.ne.s32.totalorder %s265, %s267
      %p274 = scmp.eq.s32.totalorder %s37, 1
      %p275 = por %p273, %p274
      %p276 = scmp.ne.s32.totalorder %s267, %s268
      %p277 = scmp.eq.s32.totalorder %s37, 0
      %p278 = por %p276, %p277
      %p279 = scmp.ne.s32.totalorder %s267, %s268
      %p280 = scmp.eq.s32.totalorder %s38, 1
      %p281 = por %p279, %p280
      %p283 = scmp.ne.s32.totalorder %s268, %s282
      %p284 = scmp.eq.s32.totalorder %s38, 0
      %p285 = por %p283, %p284
      %s287 = sadd.s32 %s286, 1
      %p290 = scmp.eq.s32.totalorder %s32, 1
      %p291 = scmp.ne.s32.totalorder %s286, %s288
      %p292 = scmp.eq.s32.totalorder %s32, 0
      %p293 = por %p291, %p292
      %p294 = scmp.ne.s32.totalorder %s286, %s288
      %p295 = scmp.eq.s32.totalorder %s37, 1
      %p296 = por %p294, %p295
      %p297 = scmp.ne.s32.totalorder %s288, %s289
      %p298 = scmp.eq.s32.totalorder %s37, 0
      %p299 = por %p297, %p298
      %p300 = scmp.ne.s32.totalorder %s288, %s289
      %p301 = scmp.eq.s32.totalorder %s38, 1
      %p302 = por %p300, %p301
      %p304 = scmp.ne.s32.totalorder %s289, %s303
      %p305 = scmp.eq.s32.totalorder %s38, 0
      %p306 = por %p304, %p305
      %s308 = sadd.s32 %s307, 1
      %p311 = scmp.eq.s32.totalorder %s32, 1
      %p312 = scmp.ne.s32.totalorder %s307, %s309
      %p313 = scmp.eq.s32.totalorder %s32, 0
      %p314 = por %p312, %p313
      %p315 = scmp.ne.s32.totalorder %s307, %s309
      %p316 = scmp.eq.s32.totalorder %s37, 1
      %p317 = por %p315, %p316
      %p318 = scmp.ne.s32.totalorder %s309, %s310
      %p319 = scmp.eq.s32.totalorder %s37, 0
      %p320 = por %p318, %p319
      %p321 = scmp.ne.s32.totalorder %s309, %s310
      %p322 = scmp.eq.s32.totalorder %s38, 1
      %p323 = por %p321, %p322
      %p325 = scmp.ne.s32.totalorder %s310, %s324
      %p326 = scmp.eq.s32.totalorder %s38, 0
      %p327 = por %p325, %p326
      %s328 = ssub.s32 %s39, %s51
      %s329 = ssub.s32 %s40, %s47
      %s330 = sor.u32 %s328, %s329
      %p331 = scmp.eq.s32.totalorder %s330, 0
      %s333 = sadd.s32 %s332, 1
      %s334 = scalar_select %p331, %s332, %s333
      %p337 = pneg %p331
      %p338 = scmp.eq.s32.totalorder %s32, 1
      %p339 = por %p337, %p338
      %p340 = scmp.ne.s32.totalorder %s332, %s335
      %p341 = scmp.eq.s32.totalorder %s32, 0
      %p342 = por %p340, %p341
      %p343 = scmp.ne.s32.totalorder %s332, %s335
      %p344 = scmp.eq.s32.totalorder %s37, 1
      %p345 = por %p343, %p344
      %p346 = scmp.ne.s32.totalorder %s335, %s336
      %p347 = scmp.eq.s32.totalorder %s37, 0
      %p348 = por %p346, %p347
      %p349 = scmp.ne.s32.totalorder %s335, %s336
      %p350 = scmp.eq.s32.totalorder %s38, 1
      %p351 = por %p349, %p350
      %p353 = scmp.ne.s32.totalorder %s336, %s352
      %p354 = scmp.eq.s32.totalorder %s38, 0
      %p355 = por %p353, %p354
      %p356 = scmp.le.s32.totalorder 1, %s32
      %p357 = scmp.lt.s32.totalorder %s32, 3
      %p358 = pnand %p356, %p357
      %p359 = pneg %p358
      // Predicated region
      $region9: #{tpu_custom_call.1} parent=5 // pred_check
        _
      $region10: #{tpu_custom_call.1} parent=5 // pred_check_branch
        %361 = sbr.rel (%p358) target = $region12
      $region11: #{tpu_custom_call.1} parent=5 // pred_region
        %s362 = ssub.s32 %s32, 1
        // Predicated region
        $region13: #{tpu_custom_call.1} parent=11 // pred_check
          %p363 = pneg %p173
        $region14: #{tpu_custom_call.1} parent=11 // pred_check_branch
          %365 = sbr.rel (%p363) target = $region16
        $region15: #{tpu_custom_call.1} parent=11 // pred_region
          %367 = vsyncadd [#allocation11], 0
          %s368 = sshll.u32 %s4, 4
          %s369 = int_to_ptr.hbm [resolvable:$true] %s368
          %s370 = sshll.u32 [#allocation12], 4
          %s371 = int_to_ptr.vmem [resolvable:$true] %s370
          %376 = dma.hbm_to_vmem [thread:$0]  %s369, 512, %s371, [#allocation11], 128, 128, 8
        $region16: #{tpu_custom_call.1} parent=11 // pred_fallthru
          _
        // Predicated region
        $region17: #{tpu_custom_call.1} parent=11 // pred_check
          %p377 = pneg %p194
        $region18: #{tpu_custom_call.1} parent=11 // pred_check_branch
          %379 = sbr.rel (%p377) target = $region20
        $region19: #{tpu_custom_call.1} parent=11 // pred_region
          _
        $region20: #{tpu_custom_call.1} parent=11 // pred_fallthru
          _
        // Predicated region
        $region21: #{tpu_custom_call.1} parent=11 // pred_check
          %p380 = pneg %p215
        $region22: #{tpu_custom_call.1} parent=11 // pred_check_branch
          %382 = sbr.rel (%p380) target = $region24
        $region23: #{tpu_custom_call.1} parent=11 // pred_region
          %384 = vsyncadd [#allocation14], 0
          %s385 = sshll.u32 %s6, 4
          %s386 = int_to_ptr.hbm [resolvable:$true] %s385
          %s387 = sshll.u32 [#allocation13], 4
          %s388 = int_to_ptr.vmem [resolvable:$true] %s387
          %393 = dma.hbm_to_vmem [thread:$0]  %s386, 512, %s388, [#allocation14], 128, 128, 8
        $region24: #{tpu_custom_call.1} parent=11 // pred_fallthru
          _
        // Predicated region
        $region25: #{tpu_custom_call.1} parent=11 // pred_check
          %p394 = pneg %p236
        $region26: #{tpu_custom_call.1} parent=11 // pred_check_branch
          %396 = sbr.rel (%p394) target = $region28
        $region27: #{tpu_custom_call.1} parent=11 // pred_region
          _
        $region28: #{tpu_custom_call.1} parent=11 // pred_fallthru
          _
        // Predicated region
        $region29: #{tpu_custom_call.1} parent=11 // pred_check
          %p397 = pneg %p257
        $region30: #{tpu_custom_call.1} parent=11 // pred_check_branch
          %399 = sbr.rel (%p397) target = $region32
        $region31: #{tpu_custom_call.1} parent=11 // pred_region
          %401 = vsyncadd [#allocation14], 0
          %s402 = sshll.u32 %s8, 4
          %s403 = int_to_ptr.hbm [resolvable:$true] %s402
          %s404 = sshll.u32 [#allocation15], 4
          %s405 = int_to_ptr.vmem [resolvable:$true] %s404
          %410 = dma.hbm_to_vmem [thread:$0]  %s403, 512, %s405, [#allocation14], 128, 128, 8
        $region32: #{tpu_custom_call.1} parent=11 // pred_fallthru
          _
        // Predicated region
        $region33: #{tpu_custom_call.1} parent=11 // pred_check
          %p411 = pneg %p278
        $region34: #{tpu_custom_call.1} parent=11 // pred_check_branch
          %413 = sbr.rel (%p411) target = $region36
        $region35: #{tpu_custom_call.1} parent=11 // pred_region
          _
        $region36: #{tpu_custom_call.1} parent=11 // pred_fallthru
          _
        // Predicated region
        $region37: #{tpu_custom_call.1} parent=11 // pred_check
          %p414 = pneg %p299
        $region38: #{tpu_custom_call.1} parent=11 // pred_check_branch
          %416 = sbr.rel (%p414) target = $region40
        $region39: #{tpu_custom_call.1} parent=11 // pred_region
          %418 = vsyncadd [#allocation17], 0
          %s419 = sshll.u32 %s10, 4
          %s420 = int_to_ptr.hbm [resolvable:$true] %s419
          %s421 = sshll.u32 [#allocation16], 4
          %s422 = int_to_ptr.vmem [resolvable:$true] %s421
          %427 = dma.hbm_to_vmem [thread:$0]  %s420, 512, %s422, [#allocation17], 128, 128, 8
        $region40: #{tpu_custom_call.1} parent=11 // pred_fallthru
          _
        // Predicated region
        $region41: #{tpu_custom_call.1} parent=11 // pred_check
          %p428 = pneg %p320
        $region42: #{tpu_custom_call.1} parent=11 // pred_check_branch
          %430 = sbr.rel (%p428) target = $region44
        $region43: #{tpu_custom_call.1} parent=11 // pred_region
          _
        $region44: #{tpu_custom_call.1} parent=11 // pred_fallthru
          _
      $region12: #{tpu_custom_call.1} parent=5 // pred_fallthru
        _
      %p431 = scmp.lt.s32.totalorder %s32, 2
      // Predicated region
      $region45: #{tpu_custom_call.1} parent=5 // pred_check
        %p432 = pneg %p431
      $region46: #{tpu_custom_call.1} parent=5 // pred_check_branch
        %434 = sbr.rel (%p432) target = $region48
      $region47: #{tpu_custom_call.1} parent=5 // pred_region
        // Predicated region
        $region49: #{tpu_custom_call.1} parent=47 // pred_check
          %p435 = pneg %p66
        $region50: #{tpu_custom_call.1} parent=47 // pred_check_branch
          %437 = sbr.rel (%p435) target = $region52
        $region51: #{tpu_custom_call.1} parent=47 // pred_region
          %s438 = sand.u32 %s56, 1
          %s439 = scalar_lea.sflag [#allocation5], %s438
          %s440 = sand.u32 %s56, 1
          %s441 = smul.addr %s440, 8
          %s442 = scalar_lea.vmem [#allocation4], %s441
          %444 = vsyncadd %s439, 0
          %s445 = sadd.s32 %s40, %s39
          %s446 = smul.addr %s445, 8
          %s447 = scalar_lea.hbm %s0, %s446
          %s449 = sshll.u32 %s447, 4
          %s450 = int_to_ptr.hbm [resolvable:$true] %s449
          %s451 = sshll.u32 %s442, 4
          %s452 = int_to_ptr.vmem [resolvable:$true] %s451
          %454 = dma.hbm_to_vmem [thread:$0]  %s450, 128, %s452, %s439
        $region52: #{tpu_custom_call.1} parent=47 // pred_fallthru
          _
        // Predicated region
        $region53: #{tpu_custom_call.1} parent=47 // pred_check
          %p455 = pneg %p92
        $region54: #{tpu_custom_call.1} parent=47 // pred_check_branch
          %457 = sbr.rel (%p455) target = $region56
        $region55: #{tpu_custom_call.1} parent=47 // pred_region
          %s458 = sand.u32 %s32, 1
          %s459 = scalar_lea.sflag [#allocation8], %s458
          %s460 = sand.u32 %s82, 1
          %s461 = smul.addr %s460, 8
          %s462 = scalar_lea.vmem [#allocation7], %s461
          %464 = vsyncadd %s459, 0
          %s465 = smul.addr %s39, 8
          %s466 = scalar_lea.hbm %s1, %s465
          %s468 = sshll.u32 %s466, 4
          %s469 = int_to_ptr.hbm [resolvable:$true] %s468
          %s470 = sshll.u32 %s462, 4
          %s471 = int_to_ptr.vmem [resolvable:$true] %s470
          %473 = dma.hbm_to_vmem [thread:$0]  %s469, 128, %s471, %s459
        $region56: #{tpu_custom_call.1} parent=47 // pred_fallthru
          _
        // Predicated region
        $region57: #{tpu_custom_call.1} parent=47 // pred_check
          %p474 = pneg %p118
        $region58: #{tpu_custom_call.1} parent=47 // pred_check_branch
          %476 = sbr.rel (%p474) target = $region60
        $region59: #{tpu_custom_call.1} parent=47 // pred_region
          %s477 = sand.u32 %s32, 1
          %s478 = scalar_lea.sflag [#allocation8], %s477
          %s479 = sand.u32 %s108, 1
          %s480 = smul.addr %s479, 8
          %s481 = scalar_lea.vmem [#allocation9], %s480
          %483 = vsyncadd %s478, 0
          %s484 = smul.addr %s39, 8
          %s485 = scalar_lea.hbm %s2, %s484
          %s487 = sshll.u32 %s485, 4
          %s488 = int_to_ptr.hbm [resolvable:$true] %s487
          %s489 = sshll.u32 %s481, 4
          %s490 = int_to_ptr.vmem [resolvable:$true] %s489
          %492 = dma.hbm_to_vmem [thread:$0]  %s488, 128, %s490, %s478
        $region60: #{tpu_custom_call.1} parent=47 // pred_fallthru
          _
        // Predicated region
        $region61: #{tpu_custom_call.1} parent=47 // pred_check
          %p493 = pneg %p146
        $region62: #{tpu_custom_call.1} parent=47 // pred_check_branch
          %495 = sbr.rel (%p493) target = $region64
        $region63: #{tpu_custom_call.1} parent=47 // pred_region
          %s496 = sand.u32 %s32, 1
          %s497 = scalar_lea.sflag [#allocation11], %s496
          %s498 = sand.u32 %s136, 1
          %s499 = smul.addr %s498, 32
          %s500 = scalar_lea.vmem [#allocation10], %s499
          %502 = vsyncadd %s497, 0
          %s503 = smul.addr %s39, 4
          %s504 = sadd.s32 %s40, %s503
          %s505 = smul.addr %s504, 8
          %s506 = scalar_lea.hbm %s3, %s505
          %s507 = sshll.u32 %s506, 4
          %s508 = int_to_ptr.hbm [resolvable:$true] %s507
          %s509 = sshll.u32 %s500, 4
          %s510 = int_to_ptr.vmem [resolvable:$true] %s509
          %515 = dma.hbm_to_vmem [thread:$0]  %s508, 512, %s510, %s497, 128, 128, 8
        $region64: #{tpu_custom_call.1} parent=47 // pred_fallthru
          _
      $region48: #{tpu_custom_call.1} parent=5 // pred_fallthru
        _
      %p516 = scmp.le.s32.totalorder 1, %s32
      %p517 = scmp.lt.s32.totalorder %s32, 3
      %p518 = pnand %p516, %p517
      %p519 = pneg %p518
      // Predicated region
      $region65: #{tpu_custom_call.1} parent=5 // pred_check
        _
      $region66: #{tpu_custom_call.1} parent=5 // pred_check_branch
        %521 = sbr.rel (%p518) target = $region68
      $region67: #{tpu_custom_call.1} parent=5 // pred_region
        %s522 = ssub.s32 %s32, 1
        %s523 = sand.u32 %s59, 1
        %s524 = scalar_lea.sflag [#allocation5], %s523
        %s525 = sand.u32 %s59, 1
        %s526 = smul.addr %s525, 8
        %s527 = scalar_lea.vmem [#allocation4], %s526
        // Predicated region
        $region69: #{tpu_custom_call.1} parent=67 // pred_check
          %p528 = pneg %p72
        $region70: #{tpu_custom_call.1} parent=67 // pred_check_branch
          %530 = sbr.rel (%p528) target = $region72
        $region71: #{tpu_custom_call.1} parent=67 // pred_region
          %532 = dma.done %s524, 128
        $region72: #{tpu_custom_call.1} parent=67 // pred_fallthru
          _
        %s533 = sand.u32 %s37, 1
        %s534 = scalar_lea.sflag [#allocation8], %s533
        %s535 = sand.u32 %s85, 1
        %s536 = smul.addr %s535, 8
        %s537 = scalar_lea.vmem [#allocation7], %s536
        // Predicated region
        $region73: #{tpu_custom_call.1} parent=67 // pred_check
          %p538 = pneg %p98
        $region74: #{tpu_custom_call.1} parent=67 // pred_check_branch
          %540 = sbr.rel (%p538) target = $region76
        $region75: #{tpu_custom_call.1} parent=67 // pred_region
          %542 = dma.done %s534, 128
        $region76: #{tpu_custom_call.1} parent=67 // pred_fallthru
          _
        %s543 = sand.u32 %s37, 1
        %s544 = scalar_lea.sflag [#allocation8], %s543
        %s545 = sand.u32 %s111, 1
        %s546 = smul.addr %s545, 8
        %s547 = scalar_lea.vmem [#allocation9], %s546
        // Predicated region
        $region77: #{tpu_custom_call.1} parent=67 // pred_check
          %p548 = pneg %p124
        $region78: #{tpu_custom_call.1} parent=67 // pred_check_branch
          %550 = sbr.rel (%p548) target = $region80
        $region79: #{tpu_custom_call.1} parent=67 // pred_region
          %552 = dma.done %s544, 128
        $region80: #{tpu_custom_call.1} parent=67 // pred_fallthru
          _
        %s553 = sand.u32 %s37, 1
        %s554 = scalar_lea.sflag [#allocation11], %s553
        %s555 = sand.u32 %s139, 1
        %s556 = smul.addr %s555, 32
        %s557 = scalar_lea.vmem [#allocation10], %s556
        // Predicated region
        $region81: #{tpu_custom_call.1} parent=67 // pred_check
          %p558 = pneg %p152
        $region82: #{tpu_custom_call.1} parent=67 // pred_check_branch
          %560 = sbr.rel (%p558) target = $region84
        $region83: #{tpu_custom_call.1} parent=67 // pred_region
          %562 = dma.done %s554, 512
        $region84: #{tpu_custom_call.1} parent=67 // pred_fallthru
          _
        // Predicated region
        $region85: #{tpu_custom_call.1} parent=67 // pred_check
          %p563 = pneg %p173
        $region86: #{tpu_custom_call.1} parent=67 // pred_check_branch
          %565 = sbr.rel (%p563) target = $region88
        $region87: #{tpu_custom_call.1} parent=67 // pred_region
          %567 = dma.done [#allocation11], 512
        $region88: #{tpu_custom_call.1} parent=67 // pred_fallthru
          _
        // Predicated region
        $region89: #{tpu_custom_call.1} parent=67 // pred_check
          %p568 = pneg %p215
        $region90: #{tpu_custom_call.1} parent=67 // pred_check_branch
          %570 = sbr.rel (%p568) target = $region92
        $region91: #{tpu_custom_call.1} parent=67 // pred_region
          %572 = dma.done [#allocation14], 512
        $region92: #{tpu_custom_call.1} parent=67 // pred_fallthru
          _
        // Predicated region
        $region93: #{tpu_custom_call.1} parent=67 // pred_check
          %p573 = pneg %p257
        $region94: #{tpu_custom_call.1} parent=67 // pred_check_branch
          %575 = sbr.rel (%p573) target = $region96
        $region95: #{tpu_custom_call.1} parent=67 // pred_region
          %577 = dma.done [#allocation14], 512
        $region96: #{tpu_custom_call.1} parent=67 // pred_fallthru
          _
        // Predicated region
        $region97: #{tpu_custom_call.1} parent=67 // pred_check
          %p578 = pneg %p299
        $region98: #{tpu_custom_call.1} parent=67 // pred_check_branch
          %580 = sbr.rel (%p578) target = $region100
        $region99: #{tpu_custom_call.1} parent=67 // pred_region
          %582 = dma.done [#allocation17], 512
        $region100: #{tpu_custom_call.1} parent=67 // pred_fallthru
          _
        %s583 = sand.u32 %s59, 1
        %s584 = scalar_lea.sflag [#allocation5], %s583
        %s585 = sand.u32 %s59, 1
        %s586 = smul.addr %s585, 8
        %s587 = scalar_lea.vmem [#allocation4], %s586
        %p588 = pneg %p72
        %p589 = pneg %p69
        %s590 = sand.u32 %s37, 1
        %s591 = scalar_lea.sflag [#allocation8], %s590
        %s592 = sand.u32 %s85, 1
        %s593 = smul.addr %s592, 8
        %s594 = scalar_lea.vmem [#allocation7], %s593
        %p595 = pneg %p98
        %p596 = pneg %p95
        %s597 = sand.u32 %s37, 1
        %s598 = scalar_lea.sflag [#allocation8], %s597
        %s599 = sand.u32 %s111, 1
        %s600 = smul.addr %s599, 8
        %s601 = scalar_lea.vmem [#allocation9], %s600
        %p602 = pneg %p124
        %p603 = pneg %p121
        %s604 = sand.u32 %s37, 1
        %s605 = scalar_lea.sflag [#allocation11], %s604
        %s606 = sand.u32 %s139, 1
        %s607 = smul.addr %s606, 32
        %s608 = scalar_lea.vmem [#allocation10], %s607
        %p609 = pneg %p152
        %p610 = pneg %p149
        %p611 = pneg %p173
        %p612 = pneg %p170
        %p613 = pneg %p194
        %p614 = pneg %p191
        %p615 = pneg %p215
        %p616 = pneg %p212
        %p617 = pneg %p236
        %p618 = pneg %p233
        %p619 = pneg %p257
        %p620 = pneg %p254
        %p621 = pneg %p278
        %p622 = pneg %p275
        %p623 = pneg %p299
        %p624 = pneg %p296
        %p625 = pneg %p320
        %p626 = pneg %p317
        %p627 = pneg %p348
        %p628 = pneg %p345
        %s629 = sand.u32 %s335, 1
        %s630 = scalar_lea.sflag [#allocation6], %s629
        %s631 = sand.u32 %s335, 1
        %s632 = smul.addr %s631, 8
        %s633 = scalar_lea.vmem [#allocation18], %s632
        %p634 = scmp.eq.s32.totalorder %s42, 0
        // Predicated region
        $region101: #{tpu_custom_call.1} parent=67 // pred_check
          %p635 = pneg %p634
        $region102: #{tpu_custom_call.1} parent=67 // pred_check_branch
          %637 = sbr.rel (%p635) target = $region104
        $region103: #{tpu_custom_call.1} parent=67 // pred_region
          %v638 = vld [vmem:[%s537] sm:$0xff]
          %v639 = vld [vmem:[#allocation13] sm:$0xff]
          %v640 = vld [vmem:[#allocation13 + $0x8] sm:$0xff]
          %v641 = vld [vmem:[#allocation13 + $0x10] sm:$0xff]
          %v642 = vld [vmem:[#allocation13 + $0x18] sm:$0xff]
          %v643 = vld [vmem:[%s7] sm:$0x1]
          %v645 = vperm.slane %v643, 0
          %vm647 = vcmask 261120
          %v649 = vsel %vm647, %v638, 0
          %651 = vmatpush.msra.mxu0 0.0
          %652 = vmatpush.msra.mxu0 0.0
          %653 = vmatpush.msra.mxu0 0.0
          %654 = vmatpush.msra.mxu0 0.0
          %655 = vmatpush.msra.mxu0 0.0
          %656 = vmatpush.msra.mxu0 0.0
          %657 = vmatpush.msra.mxu0 0.0
          %658 = vmatpush.msra.mxu0 0.0
          %659 = vmatpush.msra.mxu0 0.0
          %660 = vmatpush.msra.mxu0 0.0
          %661 = vmatpush.msra.mxu0 0.0
          %662 = vmatpush.msra.mxu0 0.0
          %663 = vmatpush.msra.mxu0 %v642
          %664 = vmatpush.msra.mxu0 %v641
          %665 = vmatpush.msra.mxu0 %v640
          %666 = vmatpush.msra.mxu0 %v639
          %667 = vmatmul.f32.gmra.mxu0 %v649
          %v668 = vpop.f32.mrf.mxu0
          %v669 = vadd.f32 %v645, %v668
          %670 = vdwg.mxu0
          %v671 = vld [vmem:[%s547] sm:$0xff]
          %v672 = vld [vmem:[#allocation15] sm:$0xff]
          %v673 = vld [vmem:[#allocation15 + $0x8] sm:$0xff]
          %v674 = vld [vmem:[#allocation15 + $0x10] sm:$0xff]
          %v675 = vld [vmem:[#allocation15 + $0x18] sm:$0xff]
          %v676 = vld [vmem:[%s9] sm:$0x1]
          %v678 = vperm.slane %v676, 0
          %v681 = vsel %vm647, %v671, 0
          %683 = vmatpush.msra.mxu0 0.0
          %684 = vmatpush.msra.mxu0 0.0
          %685 = vmatpush.msra.mxu0 0.0
          %686 = vmatpush.msra.mxu0 0.0
          %687 = vmatpush.msra.mxu0 0.0
          %688 = vmatpush.msra.mxu0 0.0
          %689 = vmatpush.msra.mxu0 0.0
          %690 = vmatpush.msra.mxu0 0.0
          %691 = vmatpush.msra.mxu0 0.0
          %692 = vmatpush.msra.mxu0 0.0
          %693 = vmatpush.msra.mxu0 0.0
          %694 = vmatpush.msra.mxu0 0.0
          %695 = vmatpush.msra.mxu0 %v675
          %696 = vmatpush.msra.mxu0 %v674
          %697 = vmatpush.msra.mxu0 %v673
          %698 = vmatpush.msra.mxu0 %v672
          %699 = vmatmul.f32.gmra.mxu0 %v681
          %v700 = vpop.f32.mrf.mxu0
          %v701 = vadd.f32 %v678, %v700
          %702 = vdwg.mxu0
          %vm703 = vcmask 64512
          %704 = vst.msk [vmem:[#allocation2] sm:$0xff] %vm703, %v669
          %705 = vst.msk [vmem:[#allocation3] sm:$0xff] %vm703, %v701
          %707 = vrot.lane.b32.xlu0 %v669, 120
          %v708 = vpop.permute.xlu0 %707
          %s710 = scalar_lea.vmem [#allocation2], 8
          %711 = vst.msk [vmem:[%s710] sm:$0xff] %vm703, %v708
          %713 = vrot.lane.b32.xlu0 %v701, 120
          %v714 = vpop.permute.xlu0 %713
          %s716 = scalar_lea.vmem [#allocation3], 8
          %717 = vst.msk [vmem:[%s716] sm:$0xff] %vm703, %v714
          %718 = vrot.lane.b32.xlu0 %v669, 112
          %v719 = vpop.permute.xlu0 %718
          %s721 = scalar_lea.vmem [#allocation2], 16
          %722 = vst.msk [vmem:[%s721] sm:$0xff] %vm703, %v719
          %723 = vrot.lane.b32.xlu0 %v701, 112
          %v724 = vpop.permute.xlu0 %723
          %s726 = scalar_lea.vmem [#allocation3], 16
          %727 = vst.msk [vmem:[%s726] sm:$0xff] %vm703, %v724
          %728 = vrot.lane.b32.xlu0 %v669, 104
          %v729 = vpop.permute.xlu0 %728
          %s731 = scalar_lea.vmem [#allocation2], 24
          %732 = vst.msk [vmem:[%s731] sm:$0xff] %vm703, %v729
          %733 = vrot.lane.b32.xlu0 %v701, 104
          %v734 = vpop.permute.xlu0 %733
          %s736 = scalar_lea.vmem [#allocation3], 24
          %737 = vst.msk [vmem:[%s736] sm:$0xff] %vm703, %v734
        $region104: #{tpu_custom_call.1} parent=67 // pred_fallthru
          _
        %v738 = vld [vmem:[%s527] sm:$0xff]
        %v739 = vld [vmem:[#allocation12] sm:$0xff]
        %v740 = vld [vmem:[#allocation12 + $0x8] sm:$0xff]
        %v741 = vld [vmem:[#allocation12 + $0x10] sm:$0xff]
        %v742 = vld [vmem:[#allocation12 + $0x18] sm:$0xff]
        %v743 = vld [vmem:[%s5] sm:$0x1]
        %v745 = vperm.slane %v743, 0
        %vm747 = vcmask 261120
        %v749 = vsel %vm747, %v738, 0
        %751 = vmatpush.msra.mxu0 0.0
        %752 = vmatpush.msra.mxu0 0.0
        %753 = vmatpush.msra.mxu0 0.0
        %754 = vmatpush.msra.mxu0 0.0
        %755 = vmatpush.msra.mxu0 0.0
        %756 = vmatpush.msra.mxu0 0.0
        %757 = vmatpush.msra.mxu0 0.0
        %758 = vmatpush.msra.mxu0 0.0
        %759 = vmatpush.msra.mxu0 0.0
        %760 = vmatpush.msra.mxu0 0.0
        %761 = vmatpush.msra.mxu0 0.0
        %762 = vmatpush.msra.mxu0 0.0
        %763 = vmatpush.msra.mxu0 %v742
        %764 = vmatpush.msra.mxu0 %v741
        %765 = vmatpush.msra.mxu0 %v740
        %766 = vmatpush.msra.mxu0 %v739
        %767 = vmatmul.f32.gmra.mxu0 %v749
        %v768 = vpop.f32.mrf.mxu0
        %v769 = vadd.f32 %v745, %v768
        %770 = vdwg.mxu0
        %772 = vrot.lane.b32.xlu0 %v769, 120
        %v773 = vpop.permute.xlu0 %772
        %774 = vrot.lane.b32.xlu0 %v769, 112
        %v775 = vpop.permute.xlu0 %774
        %776 = vrot.lane.b32.xlu0 %v769, 104
        %v777 = vpop.permute.xlu0 %776
        %v778 = vld [vmem:[#allocation2] sm:$0xff]
        %v779 = vld [vmem:[#allocation2 + $0x8] sm:$0xff]
        %v780 = vld [vmem:[#allocation2 + $0x10] sm:$0xff]
        %v781 = vld [vmem:[#allocation2 + $0x18] sm:$0xff]
        %v782 = vld [vmem:[#allocation3] sm:$0xff]
        %v783 = vld [vmem:[#allocation3 + $0x8] sm:$0xff]
        %v784 = vld [vmem:[#allocation3 + $0x10] sm:$0xff]
        %v785 = vld [vmem:[#allocation3 + $0x18] sm:$0xff]
        %v786 = vld [vmem:[%s557] sm:$0xff]
        %v787 = vld [vmem:[%s557 + $0x8] sm:$0xff]
        %v788 = vld [vmem:[%s557 + $0x10] sm:$0xff]
        %v789 = vld [vmem:[%s557 + $0x18] sm:$0xff]
        %vm790 = vcmask 64512
        %v791 = vsel %vm790, %v769, 0
        %v794 = vsel %vm790, %v778, 0
        %796 = vmatpush.xpose.msra.mxu0 0.0
        %797 = vmatpush.xpose.msra.mxu0 0.0
        %798 = vmatpush.xpose.msra.mxu0 0.0
        %799 = vmatpush.xpose.msra.mxu0 0.0
        %800 = vmatpush.xpose.msra.mxu0 0.0
        %801 = vmatpush.xpose.msra.mxu0 0.0
        %802 = vmatpush.xpose.msra.mxu0 0.0
        %803 = vmatpush.xpose.msra.mxu0 0.0
        %804 = vmatpush.xpose.msra.mxu0 0.0
        %805 = vmatpush.xpose.msra.mxu0 0.0
        %806 = vmatpush.xpose.msra.mxu0 0.0
        %807 = vmatpush.xpose.msra.mxu0 0.0
        %808 = vmatpush.xpose.msra.mxu0 0.0
        %809 = vmatpush.xpose.msra.mxu0 0.0
        %810 = vmatpush.xpose.msra.mxu0 0.0
        %811 = vmatpush.xpose.msra.mxu0 %v794
        %812 = vmatmul.f32.gmra.mxu0 %v791
        %v813 = vpop.f32.mrf.mxu0
        %v814 = vadd.f32 %v786, %v813
        %815 = vdwg.mxu0
        %v816 = vsel %vm790, %v773, 0
        %v819 = vsel %vm790, %v779, 0
        %821 = vmatpush.xpose.msra.mxu0 0.0
        %822 = vmatpush.xpose.msra.mxu0 0.0
        %823 = vmatpush.xpose.msra.mxu0 0.0
        %824 = vmatpush.xpose.msra.mxu0 0.0
        %825 = vmatpush.xpose.msra.mxu0 0.0
        %826 = vmatpush.xpose.msra.mxu0 0.0
        %827 = vmatpush.xpose.msra.mxu0 0.0
        %828 = vmatpush.xpose.msra.mxu0 0.0
        %829 = vmatpush.xpose.msra.mxu0 0.0
        %830 = vmatpush.xpose.msra.mxu0 0.0
        %831 = vmatpush.xpose.msra.mxu0 0.0
        %832 = vmatpush.xpose.msra.mxu0 0.0
        %833 = vmatpush.xpose.msra.mxu0 0.0
        %834 = vmatpush.xpose.msra.mxu0 0.0
        %835 = vmatpush.xpose.msra.mxu0 0.0
        %836 = vmatpush.xpose.msra.mxu0 %v819
        %837 = vmatmul.f32.gmra.mxu0 %v816
        %v838 = vpop.f32.mrf.mxu0
        %v839 = vadd.f32 %v787, %v838
        %840 = vdwg.mxu0
        %v841 = vsel %vm790, %v775, 0
        %v844 = vsel %vm790, %v780, 0
        %846 = vmatpush.xpose.msra.mxu0 0.0
        %847 = vmatpush.xpose.msra.mxu0 0.0
        %848 = vmatpush.xpose.msra.mxu0 0.0
        %849 = vmatpush.xpose.msra.mxu0 0.0
        %850 = vmatpush.xpose.msra.mxu0 0.0
        %851 = vmatpush.xpose.msra.mxu0 0.0
        %852 = vmatpush.xpose.msra.mxu0 0.0
        %853 = vmatpush.xpose.msra.mxu0 0.0
        %854 = vmatpush.xpose.msra.mxu0 0.0
        %855 = vmatpush.xpose.msra.mxu0 0.0
        %856 = vmatpush.xpose.msra.mxu0 0.0
        %857 = vmatpush.xpose.msra.mxu0 0.0
        %858 = vmatpush.xpose.msra.mxu0 0.0
        %859 = vmatpush.xpose.msra.mxu0 0.0
        %860 = vmatpush.xpose.msra.mxu0 0.0
        %861 = vmatpush.xpose.msra.mxu0 %v844
        %862 = vmatmul.f32.gmra.mxu0 %v841
        %v863 = vpop.f32.mrf.mxu0
        %v864 = vadd.f32 %v788, %v863
        %865 = vdwg.mxu0
        %v866 = vsel %vm790, %v777, 0
        %v869 = vsel %vm790, %v781, 0
        %871 = vmatpush.xpose.msra.mxu0 0.0
        %872 = vmatpush.xpose.msra.mxu0 0.0
        %873 = vmatpush.xpose.msra.mxu0 0.0
        %874 = vmatpush.xpose.msra.mxu0 0.0
        %875 = vmatpush.xpose.msra.mxu0 0.0
        %876 = vmatpush.xpose.msra.mxu0 0.0
        %877 = vmatpush.xpose.msra.mxu0 0.0
        %878 = vmatpush.xpose.msra.mxu0 0.0
        %879 = vmatpush.xpose.msra.mxu0 0.0
        %880 = vmatpush.xpose.msra.mxu0 0.0
        %881 = vmatpush.xpose.msra.mxu0 0.0
        %882 = vmatpush.xpose.msra.mxu0 0.0
        %883 = vmatpush.xpose.msra.mxu0 0.0
        %884 = vmatpush.xpose.msra.mxu0 0.0
        %885 = vmatpush.xpose.msra.mxu0 0.0
        %886 = vmatpush.xpose.msra.mxu0 %v869
        %887 = vmatmul.f32.gmra.mxu0 %v866
        %v888 = vpop.f32.mrf.mxu0
        %v889 = vadd.f32 %v789, %v888
        %890 = vdwg.mxu0
        %v891 = vsel %vm790, %v814, -inf
        %892 = vmax.xlane.f32.xlu0 %v891
        %v893 = vpop.xlane.xlu0 %892
        %v894 = vsel %vm790, %v839, -inf
        %895 = vmax.xlane.f32.xlu0 %v894
        %v896 = vpop.xlane.xlu0 %895
        %v897 = vsel %vm790, %v864, -inf
        %898 = vmax.xlane.f32.xlu0 %v897
        %v899 = vpop.xlane.xlu0 %898
        %v900 = vsel %vm790, %v889, -inf
        %901 = vmax.xlane.f32.xlu0 %v900
        %v902 = vpop.xlane.xlu0 %901
        %v903 = vsub.f32 %v814, %v893
        %v904 = vsub.f32 %v839, %v896
        %v905 = vsub.f32 %v864, %v899
        %v906 = vsub.f32 %v889, %v902
        %v907 = vmul.f32 %v903, 1.442695
        %v908 = vpow.pop %v907
        %v909 = vmul.f32 %v904, 1.442695
        %v910 = vpow.pop %v909
        %v911 = vmul.f32 %v905, 1.442695
        %v912 = vpow.pop %v911
        %v913 = vmul.f32 %v906, 1.442695
        %v914 = vpow.pop %v913
        %v915 = vsel %vm790, %v908, 0.0
        %916 = vadd.xlane.f32.xlu0 %v915
        %v917 = vpop.xlane.xlu0 %916
        %v918 = vsel %vm790, %v910, 0.0
        %919 = vadd.xlane.f32.xlu0 %v918
        %v920 = vpop.xlane.xlu0 %919
        %v921 = vsel %vm790, %v912, 0.0
        %922 = vadd.xlane.f32.xlu0 %v921
        %v923 = vpop.xlane.xlu0 %922
        %v924 = vsel %vm790, %v914, 0.0
        %925 = vadd.xlane.f32.xlu0 %v924
        %v926 = vpop.xlane.xlu0 %925
        %v927 = vrcp.pop %v917
        %v928 = vrcp.pop %v920
        %v929 = vrcp.pop %v923
        %v930 = vrcp.pop %v926
        %v931 = vmul.f32 %v908, %v927
        %v932 = vmul.f32 %v910, %v928
        %v933 = vmul.f32 %v912, %v929
        %v934 = vmul.f32 %v914, %v930
        %v936 = vsel %vm790, %v931, 0
        %938 = vmatpush.msra.mxu0 0.0
        %939 = vmatpush.msra.mxu0 0.0
        %940 = vmatpush.msra.mxu0 0.0
        %941 = vmatpush.msra.mxu0 0.0
        %942 = vmatpush.msra.mxu0 0.0
        %943 = vmatpush.msra.mxu0 0.0
        %944 = vmatpush.msra.mxu0 0.0
        %945 = vmatpush.msra.mxu0 0.0
        %946 = vmatpush.msra.mxu0 0.0
        %947 = vmatpush.msra.mxu0 0.0
        %948 = vmatpush.msra.mxu0 0.0
        %949 = vmatpush.msra.mxu0 0.0
        %950 = vmatpush.msra.mxu0 0.0
        %951 = vmatpush.msra.mxu0 0.0
        %952 = vmatpush.msra.mxu0 0.0
        %953 = vmatpush.msra.mxu0 %v782
        %954 = vmatmul.f32.gmra.mxu0 %v936
        %v955 = vpop.f32.mrf.mxu0
        %v956 = vadd.f32 0.0, %v955
        %957 = vdwg.mxu0
        %v959 = vsel %vm790, %v932, 0
        %961 = vmatpush.msra.mxu0 0.0
        %962 = vmatpush.msra.mxu0 0.0
        %963 = vmatpush.msra.mxu0 0.0
        %964 = vmatpush.msra.mxu0 0.0
        %965 = vmatpush.msra.mxu0 0.0
        %966 = vmatpush.msra.mxu0 0.0
        %967 = vmatpush.msra.mxu0 0.0
        %968 = vmatpush.msra.mxu0 0.0
        %969 = vmatpush.msra.mxu0 0.0
        %970 = vmatpush.msra.mxu0 0.0
        %971 = vmatpush.msra.mxu0 0.0
        %972 = vmatpush.msra.mxu0 0.0
        %973 = vmatpush.msra.mxu0 0.0
        %974 = vmatpush.msra.mxu0 0.0
        %975 = vmatpush.msra.mxu0 0.0
        %976 = vmatpush.msra.mxu0 %v783
        %977 = vmatmul.f32.gmra.mxu0 %v959
        %v978 = vpop.f32.mrf.mxu0
        %v979 = vadd.f32 0.0, %v978
        %980 = vdwg.mxu0
        %v982 = vsel %vm790, %v933, 0
        %984 = vmatpush.msra.mxu0 0.0
        %985 = vmatpush.msra.mxu0 0.0
        %986 = vmatpush.msra.mxu0 0.0
        %987 = vmatpush.msra.mxu0 0.0
        %988 = vmatpush.msra.mxu0 0.0
        %989 = vmatpush.msra.mxu0 0.0
        %990 = vmatpush.msra.mxu0 0.0
        %991 = vmatpush.msra.mxu0 0.0
        %992 = vmatpush.msra.mxu0 0.0
        %993 = vmatpush.msra.mxu0 0.0
        %994 = vmatpush.msra.mxu0 0.0
        %995 = vmatpush.msra.mxu0 0.0
        %996 = vmatpush.msra.mxu0 0.0
        %997 = vmatpush.msra.mxu0 0.0
        %998 = vmatpush.msra.mxu0 0.0
        %999 = vmatpush.msra.mxu0 %v784
        %1000 = vmatmul.f32.gmra.mxu0 %v982
        %v1001 = vpop.f32.mrf.mxu0
        %v1002 = vadd.f32 0.0, %v1001
        %1003 = vdwg.mxu0
        %v1005 = vsel %vm790, %v934, 0
        %1007 = vmatpush.msra.mxu0 0.0
        %1008 = vmatpush.msra.mxu0 0.0
        %1009 = vmatpush.msra.mxu0 0.0
        %1010 = vmatpush.msra.mxu0 0.0
        %1011 = vmatpush.msra.mxu0 0.0
        %1012 = vmatpush.msra.mxu0 0.0
        %1013 = vmatpush.msra.mxu0 0.0
        %1014 = vmatpush.msra.mxu0 0.0
        %1015 = vmatpush.msra.mxu0 0.0
        %1016 = vmatpush.msra.mxu0 0.0
        %1017 = vmatpush.msra.mxu0 0.0
        %1018 = vmatpush.msra.mxu0 0.0
        %1019 = vmatpush.msra.mxu0 0.0
        %1020 = vmatpush.msra.mxu0 0.0
        %1021 = vmatpush.msra.mxu0 0.0
        %1022 = vmatpush.msra.mxu0 %v785
        %1023 = vmatmul.f32.gmra.mxu0 %v1005
        %v1024 = vpop.f32.mrf.mxu0
        %v1025 = vadd.f32 0.0, %v1024
        %1026 = vdwg.mxu0
        %1028 = vrot.lane.b32.xlu0 %v979, 8
        %v1029 = vpop.permute.xlu0 %1028
        %1032 = vrot.lane.b32.xlu0 %v1002, 16
        %v1033 = vpop.permute.xlu0 %1032
        %1036 = vrot.lane.b32.xlu0 %v1025, 24
        %v1037 = vpop.permute.xlu0 %1036
        %v1039 = vsel %vm790, %v956, %v1029
        %vm1040 = vcmask 130048
        %v1041 = vsel %vm1040, %v1039, %v1033
        %vm1042 = vcmask 195584
        %v1043 = vsel %vm1042, %v1041, %v1037
        %v1044 = vld [vmem:[#allocation16] sm:$0xff]
        %v1045 = vld [vmem:[#allocation16 + $0x8] sm:$0xff]
        %v1046 = vld [vmem:[#allocation16 + $0x10] sm:$0xff]
        %v1047 = vld [vmem:[#allocation16 + $0x18] sm:$0xff]
        %v1048 = vld [vmem:[%s11] sm:$0x1]
        %v1050 = vperm.slane %v1048, 0
        %v1053 = vsel %vm747, %v1043, 0
        %1055 = vmatpush.msra.mxu0 0.0
        %1056 = vmatpush.msra.mxu0 0.0
        %1057 = vmatpush.msra.mxu0 0.0
        %1058 = vmatpush.msra.mxu0 0.0
        %1059 = vmatpush.msra.mxu0 0.0
        %1060 = vmatpush.msra.mxu0 0.0
        %1061 = vmatpush.msra.mxu0 0.0
        %1062 = vmatpush.msra.mxu0 0.0
        %1063 = vmatpush.msra.mxu0 0.0
        %1064 = vmatpush.msra.mxu0 0.0
        %1065 = vmatpush.msra.mxu0 0.0
        %1066 = vmatpush.msra.mxu0 0.0
        %1067 = vmatpush.msra.mxu0 %v1047
        %1068 = vmatpush.msra.mxu0 %v1046
        %1069 = vmatpush.msra.mxu0 %v1045
        %1070 = vmatpush.msra.mxu0 %v1044
        %1071 = vmatmul.f32.gmra.mxu0 %v1053
        %v1072 = vpop.f32.mrf.mxu0
        %v1073 = vadd.f32 %v1050, %v1072
        %1074 = vdwg.mxu0
        %1075 = vst.msk [vmem:[%s633] sm:$0xff] %vm747, %v1073
        %s1076 = sand.u32 %s335, 1
        %s1077 = scalar_lea.sflag [#allocation6], %s1076
        %s1078 = sand.u32 %s335, 1
        %s1079 = smul.addr %s1078, 8
        %s1080 = scalar_lea.vmem [#allocation18], %s1079
        // Predicated region
        $region105: #{tpu_custom_call.1} parent=67 // pred_check
          %p1081 = pneg %p345
        $region106: #{tpu_custom_call.1} parent=67 // pred_check_branch
          %1083 = sbr.rel (%p1081) target = $region108
        $region107: #{tpu_custom_call.1} parent=67 // pred_region
          %1085 = vsyncadd %s1077, 0
          %s1086 = sadd.s32 %s42, %s41
          %s1087 = smul.addr %s1086, 8
          %s1088 = scalar_lea.hbm %s12, %s1087
          %s1090 = sshll.u32 %s1080, 4
          %s1091 = int_to_ptr.vmem [resolvable:$true] %s1090
          %s1092 = sshll.u32 %s1088, 4
          %s1093 = int_to_ptr.hbm [resolvable:$true] %s1092
          %1095 = dma.vmem_to_hbm [thread:$0]  %s1091, 128, %s1093, %s1077
        $region108: #{tpu_custom_call.1} parent=67 // pred_fallthru
          _
      $region68: #{tpu_custom_call.1} parent=5 // pred_fallthru
        _
      %p1096 = scmp.le.s32.totalorder 2, %s32
      // Predicated region
      $region109: #{tpu_custom_call.1} parent=5 // pred_check
        %p1097 = pneg %p1096
      $region110: #{tpu_custom_call.1} parent=5 // pred_check_branch
        %1099 = sbr.rel (%p1097) target = $region112
      $region111: #{tpu_custom_call.1} parent=5 // pred_region
        %s1100 = ssub.s32 %s32, 2
        // Predicated region
        $region113: #{tpu_custom_call.1} parent=111 // pred_check
          %p1101 = pneg %p351
        $region114: #{tpu_custom_call.1} parent=111 // pred_check_branch
          %1103 = sbr.rel (%p1101) target = $region116
        $region115: #{tpu_custom_call.1} parent=111 // pred_region
          %s1104 = sand.u32 %s336, 1
          %s1105 = scalar_lea.sflag [#allocation6], %s1104
          %s1106 = sand.u32 %s336, 1
          %s1107 = smul.addr %s1106, 8
          %s1108 = scalar_lea.vmem [#allocation18], %s1107
          %1110 = dma.done %s1105, 128
        $region116: #{tpu_custom_call.1} parent=111 // pred_fallthru
          _
      $region112: #{tpu_custom_call.1} parent=5 // pred_fallthru
        _
    $region6: #{tpu_custom_call.1} parent=1 // loop_footer
      %s36 = sadd.s32 1, %s32
    $region7: #{tpu_custom_call.1} parent=1 // loop_footer_branch
      %31 = sbr.rel target = $region3
    $region8: #{tpu_custom_call.1} parent=1 // loop_exit
      _
    %1111 = vsyncpa [#allocation5], 1
    %s1112 = scalar_lea.sflag [#allocation5], 1
    %1113 = vsyncpa %s1112, 1
    %1114 = vsyncpa [#allocation8], 1
    %s1115 = scalar_lea.sflag [#allocation8], 1
    %1116 = vsyncpa %s1115, 1
    %1117 = vsyncpa [#allocation11], 1
    %s1118 = scalar_lea.sflag [#allocation11], 1
    %1119 = vsyncpa %s1118, 1
    %1120 = vsyncpa [#allocation14], 1
    %1121 = vsyncpa [#allocation17], 1
    %1122 = vsyncpa [#allocation6], 1
    %s1123 = scalar_lea.sflag [#allocation6], 1
    %1124 = vsyncpa %s1123, 1

</llo_original>
